<compile_context>
chip_gen: v7x
topology: tpu7x:2x2x1
jax: 0.10.0
libtpu: 0.0.40
codegen_flags: <defaults>
</compile_context>

<pallas_src>
import functools

import jax
import jax.numpy as jnp
from jax import lax
from jax.experimental import pallas as pl
from jax.experimental.pallas import tpu as pltpu


def _round_up(x, m):
    return ((x + m - 1) // m) * m


def _chamfer_kernel(x_ref, y_ref, d1_ref, d2_ref, acc1_ref, *,
                    n_valid, m_valid, n_last_off, m_last_off,
                    n_padded, m_padded):
    # x_ref   : (1, tn, 8)     augmented xyz1 rows  [x, ||x||^2, 1, 0, 0, 0]
    # y_ref   : (1, 8, tm)     augmented xyz2 cols  [-2y, 1, ||y||^2, 0, 0, 0]
    # d1_ref  : (1, tn, 1)     per-point min over all m (written at last m-tile)
    # d2_ref  : (1, 1, 1, tm)  per-(n-tile, m-tile) column-min partial
    # acc1_ref: (tn, 128)      lane-wide running-min accumulator for dist1
    i = pl.program_id(1)                      # n-tile index
    j = pl.program_id(2)                      # m-tile index (reduction for dist1)
    last_i = pl.num_programs(1) - 1
    last_j = pl.num_programs(2) - 1

    xa = x_ref[0]                             # (tn, 8)
    ya = y_ref[0]                             # (8, tm)
    tn = xa.shape[0]
    tm = ya.shape[1]

    # Single MXU matmul computes the full expansion ||x||^2 + ||y||^2 - 2 x.y.
    d = jnp.dot(xa, ya, preferred_element_type=jnp.float32,
                precision=lax.Precision.HIGHEST)            # (tn, tm)

    # ---------------- dist1: min over m (deferred cross-lane reduce) -------
    @pl.when(j == 0)
    def _():
        acc1_ref[...] = jnp.full(acc1_ref.shape, jnp.inf, acc1_ref.dtype)

    def fold_rows(tile):
        # Fold (tn, tm) into the lane-wide accumulator with VPU mins only.
        acc = acc1_ref[...]
        for c in range(tm // 128):            # static unroll, aligned slices
            acc = jnp.minimum(acc, tile[:, c * 128:(c + 1) * 128])
        acc1_ref[...] = acc

    if m_padded:
        # Only the last m-tile can contain padded xyz2 columns.
        @pl.when(j != last_j)
        def _():
            fold_rows(d)

        @pl.when(j == last_j)
        def _():
            col_ids = lax.broadcasted_iota(jnp.int32, (1, tm), 1) + m_last_off
            fold_rows(jnp.where(col_ids < m_valid, d, jnp.inf))
    else:
        fold_rows(d)

    @pl.when(j == last_j)
    def _():
        d1 = jnp.min(acc1_ref[...], axis=1, keepdims=True)   # (tn, 1)
        # Clamp on the reduced vector (max commutes with min).
        d1_ref[...] = jnp.maximum(d1, 0.0).reshape(d1_ref.shape)

    # ---------------- dist2: per-(n-tile) column-min partial ----------------
    def store_cols(tile):
        cm = jnp.min(tile, axis=0, keepdims=True)             # (1, tm)
        d2_ref[...] = jnp.maximum(cm, 0.0).reshape(d2_ref.shape)

    if n_padded:
        # Only the last n-tile can contain padded xyz1 rows.
        @pl.when(i != last_i)
        def _():
            store_cols(d)

        @pl.when(i == last_i)
        def _():
            row_ids = lax.broadcasted_iota(jnp.int32, (tn, 1), 0) + n_last_off
            store_cols(jnp.where(row_ids < n_valid, d, jnp.inf))
    else:
        store_cols(d)


def _default_tiles():
    """Generation-aware tile defaults: bigger tiles on 128 MiB-VMEM chips."""
    try:
        info = pltpu.get_tpu_info()
        vmem = getattr(info, "vmem_capacity_bytes", None) or 0
    except Exception:  # pragma: no cover - interpret mode / unknown backend
        vmem = 0
    if vmem >= 96 * 1024 * 1024:      # v5e / v6e (128 MiB VMEM per TC)
        return 512, 2048
    return 256, 2048                  # v7x (64 MiB VMEM) or unknown


def chamfer_distance_l2_split(xyz1, xyz2, ignore_zeros=False, *, tn=None, tm=None):
    """Returns (mean(dist1), mean(dist2)) like ChamferDistanceL2_split.forward."""
    B, N, D = xyz1.shape
    B2, M, D2 = xyz2.shape
    assert B == B2 and D == D2 == 3
    # TODO(synk): the (batch_size == 1 and ignore_zeros) point-filtering branch
    # needs data-dependent shapes; not implemented (default ignore_zeros=False).
    del ignore_zeros

    xyz1 = xyz1.astype(jnp.float32)
    xyz2 = xyz2.astype(jnp.float32)

    dtn, dtm = _default_tiles()
    tn = dtn if tn is None else tn
    tm = dtm if tm is None else tm
    # Lane/sublane friendly tiles, clamped to the padded extents.
    tn = min(tn, _round_up(N, 128))
    tm = min(tm, _round_up(M, 128))
    n_pad = _round_up(N, tn)
    m_pad = _round_up(M, tm)
    n_tiles = n_pad // tn
    m_tiles = m_pad // tm

    x = xyz1 if n_pad == N else jnp.pad(xyz1, ((0, 0), (0, n_pad - N), (0, 0)))
    y = xyz2 if m_pad == M else jnp.pad(xyz2, ((0, 0), (0, m_pad - M), (0, 0)))

    # Augmented operands: one K=8 matmul gives ||x - y||^2 directly.
    xx = jnp.sum(x * x, axis=-1, keepdims=True)                       # (B, n_pad, 1)
    x_aug = jnp.concatenate(
        [x, xx, jnp.ones_like(xx), jnp.zeros((B, n_pad, 3), jnp.float32)],
        axis=-1)                                                      # (B, n_pad, 8)
    yy = jnp.sum(y * y, axis=-1, keepdims=True)                       # (B, m_pad, 1)
    y_aug = jnp.concatenate(
        [-2.0 * y, jnp.ones_like(yy), yy, jnp.zeros((B, m_pad, 3), jnp.float32)],
        axis=-1)                                                      # (B, m_pad, 8)
    y_aug = jnp.transpose(y_aug, (0, 2, 1))                           # (B, 8, m_pad)

    kernel = functools.partial(
        _chamfer_kernel,
        n_valid=N, m_valid=M,
        n_last_off=(n_tiles - 1) * tn, m_last_off=(m_tiles - 1) * tm,
        n_padded=(n_pad != N), m_padded=(m_pad != M))

    d1, d2p = pl.pallas_call(
        kernel,
        out_shape=(
            jax.ShapeDtypeStruct((B, n_pad, 1), jnp.float32),
            jax.ShapeDtypeStruct((B, n_tiles, 1, m_pad), jnp.float32),
        ),
        grid_spec=pltpu.PrefetchScalarGridSpec(
            num_scalar_prefetch=0,
            grid=(B, n_tiles, m_tiles),
            in_specs=[
                pl.BlockSpec((1, tn, 8), lambda b, i, j: (b, i, 0)),
                pl.BlockSpec((1, 8, tm), lambda b, i, j: (b, 0, j)),
            ],
            out_specs=[
                pl.BlockSpec((1, tn, 1), lambda b, i, j: (b, i, 0)),
                pl.BlockSpec((1, 1, 1, tm), lambda b, i, j: (b, i, 0, j)),
            ],
            scratch_shapes=[pltpu.VMEM((tn, 128), jnp.float32)],
        ),
        # j stays "arbitrary" (dist1 accumulator + d1 block are resident across
        # it).  b AND i are parallel: d2 is now a per-(b, i) partial, so a B==1
        # cloud still feeds both v7x TensorCores via the n-tile axis.
        compiler_params=pltpu.CompilerParams(
            dimension_semantics=("parallel", "parallel", "arbitrary"),
            vmem_limit_bytes=48 * 1024 * 1024),
    )(x_aug, y_aug)

    d1 = d1[:, :N, 0]                                  # (B, N)
    d2 = jnp.min(d2p[:, :, 0, :], axis=1)[:, :M]       # min over n-tiles, (B, M)
    return jnp.mean(d1), jnp.mean(d2)


def _reference(xyz1, xyz2):
    # Pure-JAX reference (exact squared-diff formulation).
    diff = xyz1[:, :, None, :] - xyz2[:, None, :, :]   # (B, N, M, 3)
    d = jnp.sum(diff * diff, axis=-1)                  # (B, N, M)
    return jnp.mean(jnp.min(d, axis=2)), jnp.mean(jnp.min(d, axis=1))


if __name__ == "__main__":
    key = jax.random.PRNGKey(0)
    k1, k2, k3, k4, k5, k6 = jax.random.split(key, 6)

    # Config 1: small shapes; M=64 pads to 128 (masked last m-tile, single tile).
    B, N, M = 2, 128, 64
    xyz1 = jax.random.normal(k1, (B, N, 3), dtype=jnp.float32)
    xyz2 = jax.random.normal(k2, (B, M, 3), dtype=jnp.float32)
    out1, out2 = jax.block_until_ready(chamfer_distance_l2_split(xyz1, xyz2))
    ref1, ref2 = _reference(xyz1, xyz2)
    assert jnp.allclose(out1, ref1, atol=1e-4, rtol=1e-4), (out1, ref1)
    assert jnp.allclose(out2, ref2, atol=1e-4, rtol=1e-4), (out2, ref2)

    # Config 2: multi-tile grid with padding on both point axes
    # (exercises gated masks + accumulation across n/m tiles + wrapper min).
    B, N, M = 2, 300, 200
    xyz1 = jax.random.normal(k3, (B, N, 3), dtype=jnp.float32)
    xyz2 = jax.random.normal(k4, (B, M, 3), dtype=jnp.float32)
    out1, out2 = jax.block_until_ready(
        chamfer_distance_l2_split(xyz1, xyz2, tn=128, tm=128))
    ref1, ref2 = _reference(xyz1, xyz2)
    assert jnp.allclose(out1, ref1, atol=1e-4, rtol=1e-4), (out1, ref1)
    assert jnp.allclose(out2, ref2, atol=1e-4, rtol=1e-4), (out2, ref2)

    # Config 3: B=1, multi-tile, no padding (unmasked fast paths everywhere).
    B, N, M = 1, 256, 384
    xyz1 = jax.random.normal(k5, (B, N, 3), dtype=jnp.float32)
    xyz2 = jax.random.normal(k6, (B, M, 3), dtype=jnp.float32)
    out1, out2 = jax.block_until_ready(
        chamfer_distance_l2_split(xyz1, xyz2, tn=128, tm=128))
    ref1, ref2 = _reference(xyz1, xyz2)
    assert jnp.allclose(out1, ref1, atol=1e-4, rtol=1e-4), (out1, ref1)
    assert jnp.allclose(out2, ref2, atol=1e-4, rtol=1e-4), (out2, ref2)

    print("KERNEL_OK")
</pallas_src>

<mosaic_0001>
module attributes {stable_mosaic.version = 11 : i64} {
  func.func @_chamfer_kernel(%arg0: i32, %arg1: i32, %arg2: i32, %arg3: memref<1x128x8xf32, #tpu.memory_space<vmem>>, %arg4: memref<1x8x128xf32, #tpu.memory_space<vmem>>, %arg5: memref<1x128x1xf32, #tpu.memory_space<vmem>>, %arg6: memref<1x1x1x128xf32, #tpu.memory_space<vmem>>, %arg7: memref<128x128xf32, #tpu.memory_space<vmem>>) attributes {dimension_semantics = [#tpu.dimension_semantics<parallel>, #tpu.dimension_semantics<parallel>, #tpu.dimension_semantics<arbitrary>], iteration_bounds = array<i64: 2, 1, 1>, scalar_prefetch = 0 : i64, scratch_operands = 1 : i64, tpu.core_type = #tpu.core_type<tc>, window_params = [{transform_indices = @transform_0, window_bounds = array<i64: 1, 128, 8>}, {transform_indices = @transform_1, window_bounds = array<i64: 1, 8, 128>}, {transform_indices = @transform_2, window_bounds = array<i64: 1, 128, 1>}, {transform_indices = @transform_3, window_bounds = array<i64: 1, 1, 1, 128>}]} {
    %c0 = arith.constant 0 : index
    %c0_0 = arith.constant 0 : index
    %c0_1 = arith.constant 0 : index
    %0 = vector.load %arg3[%c0, %c0_0, %c0_1] : memref<1x128x8xf32, #tpu.memory_space<vmem>>, vector<1x128x8xf32>
    %1 = vector.shape_cast %0 : vector<1x128x8xf32> to vector<128x8xf32>
    %c0_2 = arith.constant 0 : index
    %c0_3 = arith.constant 0 : index
    %c0_4 = arith.constant 0 : index
    %2 = vector.load %arg4[%c0_2, %c0_3, %c0_4] : memref<1x8x128xf32, #tpu.memory_space<vmem>>, vector<1x8x128xf32>
    %3 = vector.shape_cast %2 : vector<1x8x128xf32> to vector<8x128xf32>
    %cst = arith.constant dense<0.000000e+00> : vector<128x128xf32>
    %4 = tpu.matmul %1, %3, %cst {dimension_numbers = #tpu.dot_dimension_numbers<[1], [0], [0], [1], [0, 0, 1, 1], [], []>, precision = #tpu.contract_precision<fp32>} : vector<128x8xf32>, vector<8x128xf32>, vector<128x128xf32> -> vector<128x128xf32>
    %c0_i32 = arith.constant 0 : i32
    %5 = arith.cmpi eq, %arg2, %c0_i32 : i32
    %6 = arith.extui %5 : i1 to i32
    %c0_i32_5 = arith.constant 0 : i32
    %7 = arith.cmpi ne, %6, %c0_i32_5 : i32
    scf.if %7 {
      %cst_18 = arith.constant 0x7F800000 : f32
      %23 = vector.broadcast %cst_18 : f32 to vector<128x128xf32>
      %c0_19 = arith.constant 0 : index
      %c0_20 = arith.constant 0 : index
      %24 = vector.load %arg7[%c0_19, %c0_20] : memref<128x128xf32, #tpu.memory_space<vmem>>, vector<128x128xf32>
      tpu.vector_store %arg7[%c0_19, %c0_20], %23 {strides = array<i32>} : memref<128x128xf32, #tpu.memory_space<vmem>>, vector<128x128xf32>,
    } else {
    }
    %c0_i32_6 = arith.constant 0 : i32
    %8 = arith.cmpi ne, %arg2, %c0_i32_6 : i32
    %9 = arith.extui %8 : i1 to i32
    %c0_i32_7 = arith.constant 0 : i32
    %10 = arith.cmpi ne, %9, %c0_i32_7 : i32
    scf.if %10 {
      %c0_18 = arith.constant 0 : index
      %c0_19 = arith.constant 0 : index
      %23 = vector.load %arg7[%c0_18, %c0_19] : memref<128x128xf32, #tpu.memory_space<vmem>>, vector<128x128xf32>
      %24 = arith.minimumf %23, %4 : vector<128x128xf32>
      %c0_20 = arith.constant 0 : index
      %c0_21 = arith.constant 0 : index
      %25 = vector.load %arg7[%c0_20, %c0_21] : memref<128x128xf32, #tpu.memory_space<vmem>>, vector<128x128xf32>
      tpu.vector_store %arg7[%c0_20, %c0_21], %24 {strides = array<i32>} : memref<128x128xf32, #tpu.memory_space<vmem>>, vector<128x128xf32>,
    } else {
    }
    %c0_i32_8 = arith.constant 0 : i32
    %11 = arith.cmpi eq, %arg2, %c0_i32_8 : i32
    %12 = arith.extui %11 : i1 to i32
    %c0_i32_9 = arith.constant 0 : i32
    %13 = arith.cmpi ne, %12, %c0_i32_9 : i32
    scf.if %13 {
      %23 = tpu.iota {dimensions = array<i32: 1>} : vector<1x128xi32>
      %c0_i32_18 = arith.constant 0 : i32
      %24 = vector.broadcast %c0_i32_18 : i32 to vector<1x128xi32>
      %25 = arith.addi %23, %24 : vector<1x128xi32>
      %c64_i32 = arith.constant 64 : i32
      %26 = vector.broadcast %c64_i32 : i32 to vector<1x128xi32>
      %27 = arith.cmpi slt, %25, %26 : vector<1x128xi32>
      %cst_19 = arith.constant 0x7F800000 : f32
      %28 = vector.shape_cast %27 : vector<1x128xi1> to vector<1x128xi1>
      %29 = vector.broadcast %28 : vector<1x128xi1> to vector<128x128xi1>
      %30 = vector.broadcast %cst_19 : f32 to vector<128x128xf32>
      %31 = arith.select %29, %4, %30 : vector<128x128xi1>, vector<128x128xf32>
      %c0_20 = arith.constant 0 : index
      %c0_21 = arith.constant 0 : index
      %32 = vector.load %arg7[%c0_20, %c0_21] : memref<128x128xf32, #tpu.memory_space<vmem>>, vector<128x128xf32>
      %33 = arith.minimumf %32, %31 : vector<128x128xf32>
      %c0_22 = arith.constant 0 : index
      %c0_23 = arith.constant 0 : index
      %34 = vector.load %arg7[%c0_22, %c0_23] : memref<128x128xf32, #tpu.memory_space<vmem>>, vector<128x128xf32>
      tpu.vector_store %arg7[%c0_22, %c0_23], %33 {strides = array<i32>} : memref<128x128xf32, #tpu.memory_space<vmem>>, vector<128x128xf32>,
    } else {
    }
    %c0_i32_10 = arith.constant 0 : i32
    %14 = arith.cmpi eq, %arg2, %c0_i32_10 : i32
    %15 = arith.extui %14 : i1 to i32
    %c0_i32_11 = arith.constant 0 : i32
    %16 = arith.cmpi ne, %15, %c0_i32_11 : i32
    scf.if %16 {
      %c0_18 = arith.constant 0 : index
      %c0_19 = arith.constant 0 : index
      %23 = vector.load %arg7[%c0_18, %c0_19] : memref<128x128xf32, #tpu.memory_space<vmem>>, vector<128x128xf32>
      %cst_20 = arith.constant dense<0x7F800000> : vector<128xf32>
      %24 = vector.multi_reduction <minimumf>, %23, %cst_20 [1] : vector<128x128xf32> to vector<128xf32>
      %25 = vector.shape_cast %24 : vector<128xf32> to vector<128x1xf32>
      %cst_21 = arith.constant 0.000000e+00 : f32
      %26 = vector.broadcast %cst_21 : f32 to vector<128x1xf32>
      %27 = arith.maximumf %25, %26 : vector<128x1xf32>
      %28 = vector.shape_cast %27 : vector<128x1xf32> to vector<1x128x1xf32>
      %c0_22 = arith.constant 0 : index
      %c0_23 = arith.constant 0 : index
      %c0_24 = arith.constant 0 : index
      %29 = vector.load %arg5[%c0_22, %c0_23, %c0_24] : memref<1x128x1xf32, #tpu.memory_space<vmem>>, vector<1x128x1xf32>
      tpu.vector_store %arg5[%c0_22, %c0_23, %c0_24], %28 {strides = array<i32>} : memref<1x128x1xf32, #tpu.memory_space<vmem>>, vector<1x128x1xf32>,
    } else {
    }
    %cst_12 = arith.constant dense<0x7F800000> : vector<128xf32>
    %17 = vector.multi_reduction <minimumf>, %4, %cst_12 [0] : vector<128x128xf32> to vector<128xf32>
    %18 = vector.shape_cast %17 : vector<128xf32> to vector<1x128xf32>
    %cst_13 = arith.constant 0.000000e+00 : f32
    %19 = vector.broadcast %cst_13 : f32 to vector<1x128xf32>
    %20 = arith.maximumf %18, %19 : vector<1x128xf32>
    %21 = vector.shape_cast %20 : vector<1x128xf32> to vector<1x1x1x128xf32>
    %c0_14 = arith.constant 0 : index
    %c0_15 = arith.constant 0 : index
    %c0_16 = arith.constant 0 : index
    %c0_17 = arith.constant 0 : index
    %22 = vector.load %arg6[%c0_14, %c0_15, %c0_16, %c0_17] : memref<1x1x1x128xf32, #tpu.memory_space<vmem>>, vector<1x1x1x128xf32>
    tpu.vector_store %arg6[%c0_14, %c0_15, %c0_16, %c0_17], %21 {strides = array<i32>} : memref<1x1x1x128xf32, #tpu.memory_space<vmem>>, vector<1x1x1x128xf32>,
    return
  }
  func.func @transform_0(%arg0: i32, %arg1: i32, %arg2: i32) -> (i32, i32, i32) {
    %c0_i32 = arith.constant 0 : i32
    %c0_i32_0 = arith.constant 0 : i32
    return %arg0, %arg1, %c0_i32 : i32, i32, i32
  }
  func.func @transform_1(%arg0: i32, %arg1: i32, %arg2: i32) -> (i32, i32, i32) {
    %c0_i32 = arith.constant 0 : i32
    %c0_i32_0 = arith.constant 0 : i32
    return %arg0, %c0_i32, %arg2 : i32, i32, i32
  }
  func.func @transform_2(%arg0: i32, %arg1: i32, %arg2: i32) -> (i32, i32, i32) {
    %c0_i32 = arith.constant 0 : i32
    %c0_i32_0 = arith.constant 0 : i32
    return %arg0, %arg1, %c0_i32 : i32, i32, i32
  }
  func.func @transform_3(%arg0: i32, %arg1: i32, %arg2: i32) -> (i32, i32, i32, i32) {
    %c0_i32 = arith.constant 0 : i32
    %c0_i32_0 = arith.constant 0 : i32
    return %arg0, %arg1, %c0_i32, %arg2 : i32, i32, i32, i32
  }
}

</mosaic_0001>

<llo_original>
// kernel: tpu_custom_call.1
$region0: #{tpu_custom_call.1}
  #allocation0 [shape = 'u32[]', space=smem, size = 0x4, offset = 0x4, fixed_abs, tag = 'smem constant byte address 0x4 - core index']
  #allocation1 [shape = 'u32[144,128]{1,0:T(1,128)}', space=vmem, size = 0x12000, scoped, tag = 'internal scratch']
  #allocation2 [shape = 'f32[128,128]{1,0:T(8,128)}', space=vmem, size = 0x10000, scoped, tag = 'scratch operand']
  %s0 = inlined_call_operand.vmem [shape: f32[2,128,8], index: 0, kind: input, shape index: {}]
  %s1 = inlined_call_operand.vmem [shape: f32[2,8,128], index: 1, kind: input, shape index: {}]
  %s2 = inlined_call_operand.vmem [shape: f32[2,128,1], index: 2, kind: output, shape index: {0}]
  %s3 = inlined_call_operand.hbm [shape: f32[2,1,1,128], index: 3, kind: output, shape index: {1}]
  %4 = xla_tuple %s2, %s3
  %s5 = sld [smem:[#allocation0]]
  $region61: #{tpu_custom_call.1} parent=0
    _
  %s7 = ssub.s32 1, %s5
  %s8 = scalar_select 0, %s7, %s5
  $region1: #{tpu_custom_call.1} parent=0
    #allocation3 [shape = 'u8[1024]{0}', space=vmem, size = 0x400, scoped, tag = 'output window, operand 1']
    #allocation4 [shape = 's32[2]{0}', space=sflag, size = 0x8, scoped, tag = 'scoped memory for tpu_custom_call.1']
    %9 = vsyncpa [#allocation4], 0
    %s10 = scalar_lea.sflag [#allocation4], 1
    %11 = vsyncpa %s10, 0
    loop: start=0, step=1, limit=4
    $region2: #{tpu_custom_call.1} parent=1 // loop_pre_header
      _
    $region3: #{tpu_custom_call.1} parent=1 // loop_header
      %s13 = sphi 0, %s17
      %p14 = scmp.ge.s32.totalorder %s13, 4
      %s20 = sphi 0, %s39
      %s21 = sphi 0, %s35
      %s22 = sphi 0, %s31
      %s23 = sphi 0, %s20
      %s24 = sphi 0, %s21
      %s25 = sphi 0, %s22
      %s26 = sphi 0, %s23
      %s27 = sphi 0, %s24
      %s28 = sphi 0, %s25
      %s44 = sphi 0, %s46
      %s47 = sphi 0, %s44
      %s48 = sphi 0, %s47
      %s64 = sphi 0, %s48
      %s72 = sphi 0, %s74
      %s75 = sphi 0, %s72
      %s76 = sphi 0, %s75
      %s92 = sphi 0, %s76
      %s100 = sphi 0, %s102
      %s103 = sphi 0, %s100
      %s104 = sphi 0, %s103
      %s120 = sphi 0, %s104
      %s130 = sphi 0, %s132
      %s133 = sphi 0, %s130
      %s134 = sphi 0, %s133
      %s150 = sphi 0, %s134
    $region4: #{tpu_custom_call.1} parent=1 // loop_header_branch
      %16 = sbr.rel (%p14) target = $region8
    $region5: #{tpu_custom_call.1} parent=1 // loop_body
      %s18 = ssub.s32 %s13, 1
      %s19 = ssub.s32 %s13, 2
      %s29 = sadd.s32 1, %s22
      %p30 = scmp.ge.s32.totalorder %s29, 1
      %s31 = scalar_select %p30, 0, %s29
      %s32 = sadd.s32 1, %s21
      %s33 = scalar_select %p30, %s32, %s21
      %p34 = scmp.ge.s32.totalorder %s33, 1
      %s35 = scalar_select %p34, 0, %s33
      %s36 = sadd.s32 1, %s20
      %s37 = scalar_select %p34, %s36, %s20
      %p38 = scmp.ge.s32.totalorder %s37, 2
      %s39 = scalar_select %p38, 0, %s37
      %s40 = ssub.s32 %s20, %s39
      %s41 = ssub.s32 %s21, %s35
      %s42 = sor.u32 %s40, %s41
      %p43 = scmp.eq.s32.totalorder %s42, 0
      %s45 = sadd.s32 %s44, 1
      %s46 = scalar_select %p43, %s44, %s45
      %p49 = pneg %p43
      %p50 = scmp.eq.s32.totalorder %s13, 1
      %p51 = por %p49, %p50
      %p52 = scmp.ne.s32.totalorder %s44, %s47
      %p53 = scmp.eq.s32.totalorder %s13, 0
      %p54 = por %p52, %p53
      %p55 = scmp.ne.s32.totalorder %s44, %s47
      %p56 = scmp.eq.s32.totalorder %s18, 1
      %p57 = por %p55, %p56
      %p58 = scmp.ne.s32.totalorder %s47, %s48
      %p59 = scmp.eq.s32.totalorder %s18, 0
      %p60 = por %p58, %p59
      %p61 = scmp.ne.s32.totalorder %s47, %s48
      %p62 = scmp.eq.s32.totalorder %s19, 1
      %p63 = por %p61, %p62
      %p65 = scmp.ne.s32.totalorder %s48, %s64
      %p66 = scmp.eq.s32.totalorder %s19, 0
      %p67 = por %p65, %p66
      %s68 = ssub.s32 %s20, %s39
      %s69 = ssub.s32 %s22, %s31
      %s70 = sor.u32 %s68, %s69
      %p71 = scmp.eq.s32.totalorder %s70, 0
      %s73 = sadd.s32 %s72, 1
      %s74 = scalar_select %p71, %s72, %s73
      %p77 = pneg %p71
      %p78 = scmp.eq.s32.totalorder %s13, 1
      %p79 = por %p77, %p78
      %p80 = scmp.ne.s32.totalorder %s72, %s75
      %p81 = scmp.eq.s32.totalorder %s13, 0
      %p82 = por %p80, %p81
      %p83 = scmp.ne.s32.totalorder %s72, %s75
      %p84 = scmp.eq.s32.totalorder %s18, 1
      %p85 = por %p83, %p84
      %p86 = scmp.ne.s32.totalorder %s75, %s76
      %p87 = scmp.eq.s32.totalorder %s18, 0
      %p88 = por %p86, %p87
      %p89 = scmp.ne.s32.totalorder %s75, %s76
      %p90 = scmp.eq.s32.totalorder %s19, 1
      %p91 = por %p89, %p90
      %p93 = scmp.ne.s32.totalorder %s76, %s92
      %p94 = scmp.eq.s32.totalorder %s19, 0
      %p95 = por %p93, %p94
      %s96 = ssub.s32 %s20, %s39
      %s97 = ssub.s32 %s21, %s35
      %s98 = sor.u32 %s96, %s97
      %p99 = scmp.eq.s32.totalorder %s98, 0
      %s101 = sadd.s32 %s100, 1
      %s102 = scalar_select %p99, %s100, %s101
      %p105 = pneg %p99
      %p106 = scmp.eq.s32.totalorder %s13, 1
      %p107 = por %p105, %p106
      %p108 = scmp.ne.s32.totalorder %s100, %s103
      %p109 = scmp.eq.s32.totalorder %s13, 0
      %p110 = por %p108, %p109
      %p111 = scmp.ne.s32.totalorder %s100, %s103
      %p112 = scmp.eq.s32.totalorder %s18, 1
      %p113 = por %p111, %p112
      %p114 = scmp.ne.s32.totalorder %s103, %s104
      %p115 = scmp.eq.s32.totalorder %s18, 0
      %p116 = por %p114, %p115
      %p117 = scmp.ne.s32.totalorder %s103, %s104
      %p118 = scmp.eq.s32.totalorder %s19, 1
      %p119 = por %p117, %p118
      %p121 = scmp.ne.s32.totalorder %s104, %s120
      %p122 = scmp.eq.s32.totalorder %s19, 0
      %p123 = por %p121, %p122
      %s124 = ssub.s32 %s20, %s39
      %s125 = ssub.s32 %s21, %s35
      %s126 = sor.u32 %s124, %s125
      %s127 = ssub.s32 %s22, %s31
      %s128 = sor.u32 %s126, %s127
      %p129 = scmp.eq.s32.totalorder %s128, 0
      %s131 = sadd.s32 %s130, 1
      %s132 = scalar_select %p129, %s130, %s131
      %p135 = pneg %p129
      %p136 = scmp.eq.s32.totalorder %s13, 1
      %p137 = por %p135, %p136
      %p138 = scmp.ne.s32.totalorder %s130, %s133
      %p139 = scmp.eq.s32.totalorder %s13, 0
      %p140 = por %p138, %p139
      %p141 = scmp.ne.s32.totalorder %s130, %s133
      %p142 = scmp.eq.s32.totalorder %s18, 1
      %p143 = por %p141, %p142
      %p144 = scmp.ne.s32.totalorder %s133, %s134
      %p145 = scmp.eq.s32.totalorder %s18, 0
      %p146 = por %p144, %p145
      %p147 = scmp.ne.s32.totalorder %s133, %s134
      %p148 = scmp.eq.s32.totalorder %s19, 1
      %p149 = por %p147, %p148
      %p151 = scmp.ne.s32.totalorder %s134, %s150
      %p152 = scmp.eq.s32.totalorder %s19, 0
      %p153 = por %p151, %p152
      %p154 = scmp.le.s32.totalorder 1, %s13
      %p155 = scmp.lt.s32.totalorder %s13, 3
      %p156 = pnand %p154, %p155
      %p157 = pneg %p156
      // Predicated region
      $region9: #{tpu_custom_call.1} parent=5 // pred_check
        _
      $region10: #{tpu_custom_call.1} parent=5 // pred_check_branch
        %159 = sbr.rel (%p156) target = $region12
      $region11: #{tpu_custom_call.1} parent=5 // pred_region
        %s160 = ssub.s32 %s13, 1
      $region12: #{tpu_custom_call.1} parent=5 // pred_fallthru
        _
      %p161 = scmp.lt.s32.totalorder %s13, 2
      // Predicated region
      $region13: #{tpu_custom_call.1} parent=5 // pred_check
        %p162 = pneg %p161
      $region14: #{tpu_custom_call.1} parent=5 // pred_check_branch
        %164 = sbr.rel (%p162) target = $region16
      $region15: #{tpu_custom_call.1} parent=5 // pred_region
        // Predicated region
        $region17: #{tpu_custom_call.1} parent=15 // pred_check
          %p165 = pneg %p54
        $region18: #{tpu_custom_call.1} parent=15 // pred_check_branch
          %167 = sbr.rel (%p165) target = $region20
        $region19: #{tpu_custom_call.1} parent=15 // pred_region
          %s168 = smul.u32 16, %s21
          %p169 = scmp.lt.s32.totalorder %s20, 1
          %s170 = scalar_select %p169, %s20, 1
          %p171 = scmp.lt.s32.totalorder %s168, 15
          %s172 = scalar_select %p171, %s168, 15
          %s173 = smul.addr %s170, 16
          %s174 = sadd.s32 %s172, %s173
          %s175 = smul.addr %s174, 8
          %s176 = scalar_lea.vmem %s0, %s175
          %s177 = smul.u32 16, %s21
        $region20: #{tpu_custom_call.1} parent=15 // pred_fallthru
          _
        // Predicated region
        $region21: #{tpu_custom_call.1} parent=15 // pred_check
          %p178 = pneg %p82
        $region22: #{tpu_custom_call.1} parent=15 // pred_check_branch
          %180 = sbr.rel (%p178) target = $region24
        $region23: #{tpu_custom_call.1} parent=15 // pred_region
          %p181 = scmp.lt.s32.totalorder %s20, 1
          %s182 = scalar_select %p181, %s20, 1
          %p183 = scmp.lt.s32.totalorder %s22, 0
          %s184 = scalar_select %p183, %s22, 0
          %s185 = sadd.s32 %s184, %s182
          %s186 = smul.addr %s185, 8
          %s187 = scalar_lea.vmem %s1, %s186
        $region24: #{tpu_custom_call.1} parent=15 // pred_fallthru
          _
      $region16: #{tpu_custom_call.1} parent=5 // pred_fallthru
        _
      %p188 = scmp.le.s32.totalorder 1, %s13
      %p189 = scmp.lt.s32.totalorder %s13, 3
      %p190 = pnand %p188, %p189
      %p191 = pneg %p190
      // Predicated region
      $region25: #{tpu_custom_call.1} parent=5 // pred_check
        _
      $region26: #{tpu_custom_call.1} parent=5 // pred_check_branch
        %193 = sbr.rel (%p190) target = $region28
      $region27: #{tpu_custom_call.1} parent=5 // pred_region
        %s194 = ssub.s32 %s13, 1
        %s195 = smul.u32 16, %s24
        %p196 = scmp.lt.s32.totalorder %s23, 1
        %s197 = scalar_select %p196, %s23, 1
        %p198 = scmp.lt.s32.totalorder %s195, 15
        %s199 = scalar_select %p198, %s195, 15
        %s200 = smul.addr %s197, 16
        %s201 = sadd.s32 %s199, %s200
        %s202 = smul.addr %s201, 8
        %s203 = scalar_lea.vmem %s0, %s202
        %p204 = pneg %p60
        %p205 = pneg %p57
        %p206 = scmp.lt.s32.totalorder %s23, 1
        %s207 = scalar_select %p206, %s23, 1
        %p208 = scmp.lt.s32.totalorder %s25, 0
        %s209 = scalar_select %p208, %s25, 0
        %s210 = sadd.s32 %s209, %s207
        %s211 = smul.addr %s210, 8
        %s212 = scalar_lea.vmem %s1, %s211
        %p213 = pneg %p88
        %p214 = pneg %p85
        %p215 = pneg %p116
        %p216 = pneg %p113
        %s217 = smul.u32 16, %s24
        %p218 = scmp.lt.s32.totalorder %s23, 1
        %s219 = scalar_select %p218, %s23, 1
        %p220 = scmp.lt.s32.totalorder %s217, 15
        %s221 = scalar_select %p220, %s217, 15
        %s222 = smul.addr %s219, 16
        %s223 = sadd.s32 %s221, %s222
        %s224 = smul.addr %s223, 8
        %s225 = scalar_lea.vmem %s2, %s224
        %p226 = pneg %p146
        %p227 = pneg %p143
        %s228 = sand.u32 %s133, 1
        %s229 = scalar_lea.sflag [#allocation4], %s228
        %s230 = sand.u32 %s133, 1
        %s231 = scalar_lea.vmem [#allocation3], %s230
        %s232 = smul.u32 16, %s24
        %p233 = scmp.lt.s32.totalorder %s23, 1
        %s234 = scalar_select %p233, %s23, 1
        %p235 = scmp.lt.s32.totalorder %s232, 15
        %s236 = scalar_select %p235, %s232, 15
        %s237 = smul.addr %s234, 16
        %s238 = sadd.s32 %s236, %s237
        %s239 = smul.addr %s238, 8
        %s240 = scalar_lea.vmem %s0, %s239
        %s241 = smul.u32 16, %s24
        %p242 = scmp.lt.s32.totalorder %s23, 1
        %s243 = scalar_select %p242, %s23, 1
        %p244 = scmp.lt.s32.totalorder %s25, 0
        %s245 = scalar_select %p244, %s25, 0
        %s246 = sadd.s32 %s245, %s243
        %s247 = smul.addr %s246, 8
        %s248 = scalar_lea.vmem %s1, %s247
        %s249 = smul.u32 16, %s24
        %p250 = scmp.lt.s32.totalorder %s23, 1
        %s251 = scalar_select %p250, %s23, 1
        %p252 = scmp.lt.s32.totalorder %s249, 15
        %s253 = scalar_select %p252, %s249, 15
        %s254 = smul.addr %s251, 16
        %s255 = sadd.s32 %s253, %s254
        %s256 = smul.addr %s255, 8
        %s257 = scalar_lea.vmem %s2, %s256
        %s258 = smul.u32 16, %s24
        %v259 = vld [vmem:[%s240] sm:$0xff]
        %v260 = vld [vmem:[%s240 + $0x8] sm:$0xff]
        %v261 = vld [vmem:[%s240 + $0x10] sm:$0xff]
        %v262 = vld [vmem:[%s240 + $0x18] sm:$0xff]
        %v263 = vld [vmem:[%s240 + $0x20] sm:$0xff]
        %v264 = vld [vmem:[%s240 + $0x28] sm:$0xff]
        %v265 = vld [vmem:[%s240 + $0x30] sm:$0xff]
        %v266 = vld [vmem:[%s240 + $0x38] sm:$0xff]
        %v267 = vld [vmem:[%s240 + $0x40] sm:$0xff]
        %v268 = vld [vmem:[%s240 + $0x48] sm:$0xff]
        %v269 = vld [vmem:[%s240 + $0x50] sm:$0xff]
        %v270 = vld [vmem:[%s240 + $0x58] sm:$0xff]
        %v271 = vld [vmem:[%s240 + $0x60] sm:$0xff]
        %v272 = vld [vmem:[%s240 + $0x68] sm:$0xff]
        %v273 = vld [vmem:[%s240 + $0x70] sm:$0xff]
        %v274 = vld [vmem:[%s240 + $0x78] sm:$0xff]
        %v275 = vld [vmem:[%s248] sm:$0xff]
        %vm276 = vcmask 64512
        %v278 = vsel %vm276, %v259, 0
        %v281 = vsel %vm276, %v260, 0
        %v284 = vsel %vm276, %v261, 0
        %v287 = vsel %vm276, %v262, 0
        %v290 = vsel %vm276, %v263, 0
        %v293 = vsel %vm276, %v264, 0
        %v296 = vsel %vm276, %v265, 0
        %v299 = vsel %vm276, %v266, 0
        %v302 = vsel %vm276, %v267, 0
        %v305 = vsel %vm276, %v268, 0
        %v308 = vsel %vm276, %v269, 0
        %v311 = vsel %vm276, %v270, 0
        %v314 = vsel %vm276, %v271, 0
        %v317 = vsel %vm276, %v272, 0
        %v320 = vsel %vm276, %v273, 0
        %v323 = vsel %vm276, %v274, 0
        %325 = vmatprep.subr.mxu0 0.0
        %v326 = vand.u32 %v275, 4294901760
        %327 = vmatpush1.msra.mxu0 %v326
        %328 = vmatprep.subr.mxu0 0.0
        %329 = vmatpush1.msra.mxu0 0.0
        %330 = vmatprep.subr.mxu0 0.0
        %331 = vmatpush1.msra.mxu0 0.0
        %332 = vmatprep.subr.mxu0 0.0
        %333 = vmatpush1.msra.mxu0 0.0
        %334 = vmatprep.subr.mxu0 0.0
        %335 = vmatpush1.msra.mxu0 0.0
        %336 = vmatprep.subr.mxu0 0.0
        %337 = vmatpush1.msra.mxu0 0.0
        %338 = vmatprep.subr.mxu0 0.0
        %339 = vmatpush1.msra.mxu0 0.0
        %340 = vmatprep.subr.mxu0 0.0
        %341 = vmatpush1.msra.mxu0 0.0
        %342 = vmatprep.subr.mxu0 0.0
        %343 = vmatpush1.msra.mxu0 0.0
        %344 = vmatprep.subr.mxu0 0.0
        %345 = vmatpush1.msra.mxu0 0.0
        %346 = vmatprep.subr.mxu0 0.0
        %347 = vmatpush1.msra.mxu0 0.0
        %348 = vmatprep.subr.mxu0 0.0
        %349 = vmatpush1.msra.mxu0 0.0
        %350 = vmatprep.subr.mxu0 0.0
        %351 = vmatpush1.msra.mxu0 0.0
        %352 = vmatprep.subr.mxu0 0.0
        %353 = vmatpush1.msra.mxu0 0.0
        %354 = vmatprep.subr.mxu0 0.0
        %355 = vmatpush1.msra.mxu0 0.0
        %356 = vmatprep.subr.mxu0 0.0
        %357 = vmatpush1.msra.mxu0 0.0
        %358 = vmatprep.subr.mxu0 0.0
        %359 = vmatpush1.msra.mxu0 0.0
        %360 = vmatprep.subr.mxu0 0.0
        %361 = vmatpush1.msra.mxu0 0.0
        %362 = vmatprep.subr.mxu0 0.0
        %363 = vmatpush1.msra.mxu0 0.0
        %364 = vmatprep.subr.mxu0 0.0
        %365 = vmatpush1.msra.mxu0 0.0
        %366 = vmatprep.subr.mxu0 0.0
        %367 = vmatpush1.msra.mxu0 0.0
        %368 = vmatprep.subr.mxu0 0.0
        %369 = vmatpush1.msra.mxu0 0.0
        %370 = vmatprep.subr.mxu0 0.0
        %371 = vmatpush1.msra.mxu0 0.0
        %372 = vmatprep.subr.mxu0 0.0
        %373 = vmatpush1.msra.mxu0 0.0
        %374 = vmatprep.subr.mxu0 0.0
        %375 = vmatpush1.msra.mxu0 0.0
        %376 = vmatprep.subr.mxu0 0.0
        %377 = vmatpush1.msra.mxu0 0.0
        %378 = vmatprep.subr.mxu0 0.0
        %379 = vmatpush1.msra.mxu0 0.0
        %380 = vmatprep.subr.mxu0 0.0
        %381 = vmatpush1.msra.mxu0 0.0
        %382 = vmatprep.subr.mxu0 0.0
        %383 = vmatpush1.msra.mxu0 0.0
        %384 = vmatprep.subr.mxu0 0.0
        %385 = vmatpush1.msra.mxu0 0.0
        %386 = vmatprep.subr.mxu0 0.0
        %387 = vmatpush1.msra.mxu0 0.0
        %388 = vmatprep.subr.mxu0 0.0
        %389 = vmatpush1.msra.mxu0 0.0
        %390 = vmatprep.mubr.f32.mxu0 0.0
        %v391 = vand.u32 %v278, 4294901760
        %v392 = vsub.f32 %v278, %v391
        %v393 = vand.u32 %v392, 4294901760
        %v394 = vsub.f32 %v392, %v393
        %v395 = vand.u32 %v394, 4294901760
        %396 = vmatmul.mubr.f32.gmra.mrb[0].mxu0 %v395
        %v397 = vpop.f32.mrb[0].mxu0
        %v398 = vadd.f32 0.0, %v397
        %v399 = vpop.f32.mrb[0].mxu0
        %400 = vmatprep.mubr.f32.mxu0 0.0
        %v401 = vand.u32 %v281, 4294901760
        %v402 = vsub.f32 %v281, %v401
        %v403 = vand.u32 %v402, 4294901760
        %v404 = vsub.f32 %v402, %v403
        %v405 = vand.u32 %v404, 4294901760
        %406 = vmatmul.mubr.f32.gmra.mrb[0].mxu0 %v405
        %v407 = vpop.f32.mrb[0].mxu0
        %v408 = vadd.f32 0.0, %v407
        %v409 = vpop.f32.mrb[0].mxu0
        %410 = vmatprep.mubr.f32.mxu0 0.0
        %v411 = vand.u32 %v284, 4294901760
        %v412 = vsub.f32 %v284, %v411
        %v413 = vand.u32 %v412, 4294901760
        %v414 = vsub.f32 %v412, %v413
        %v415 = vand.u32 %v414, 4294901760
        %416 = vmatmul.mubr.f32.gmra.mrb[0].mxu0 %v415
        %v417 = vpop.f32.mrb[0].mxu0
        %v418 = vadd.f32 0.0, %v417
        %v419 = vpop.f32.mrb[0].mxu0
        %420 = vmatprep.mubr.f32.mxu0 0.0
        %v421 = vand.u32 %v287, 4294901760
        %v422 = vsub.f32 %v287, %v421
        %v423 = vand.u32 %v422, 4294901760
        %v424 = vsub.f32 %v422, %v423
        %v425 = vand.u32 %v424, 4294901760
        %426 = vmatmul.mubr.f32.gmra.mrb[0].mxu0 %v425
        %v427 = vpop.f32.mrb[0].mxu0
        %v428 = vadd.f32 0.0, %v427
        %v429 = vpop.f32.mrb[0].mxu0
        %430 = vmatprep.mubr.f32.mxu0 0.0
        %v431 = vand.u32 %v290, 4294901760
        %v432 = vsub.f32 %v290, %v431
        %v433 = vand.u32 %v432, 4294901760
        %v434 = vsub.f32 %v432, %v433
        %v435 = vand.u32 %v434, 4294901760
        %436 = vmatmul.mubr.f32.gmra.mrb[0].mxu0 %v435
        %v437 = vpop.f32.mrb[0].mxu0
        %v438 = vadd.f32 0.0, %v437
        %v439 = vpop.f32.mrb[0].mxu0
        %440 = vmatprep.mubr.f32.mxu0 0.0
        %v441 = vand.u32 %v293, 4294901760
        %v442 = vsub.f32 %v293, %v441
        %v443 = vand.u32 %v442, 4294901760
        %v444 = vsub.f32 %v442, %v443
        %v445 = vand.u32 %v444, 4294901760
        %446 = vmatmul.mubr.f32.gmra.mrb[0].mxu0 %v445
        %v447 = vpop.f32.mrb[0].mxu0
        %v448 = vadd.f32 0.0, %v447
        %v449 = vpop.f32.mrb[0].mxu0
        %450 = vmatprep.mubr.f32.mxu0 0.0
        %v451 = vand.u32 %v296, 4294901760
        %v452 = vsub.f32 %v296, %v451
        %v453 = vand.u32 %v452, 4294901760
        %v454 = vsub.f32 %v452, %v453
        %v455 = vand.u32 %v454, 4294901760
        %456 = vmatmul.mubr.f32.gmra.mrb[0].mxu0 %v455
        %v457 = vpop.f32.mrb[0].mxu0
        %v458 = vadd.f32 0.0, %v457
        %v459 = vpop.f32.mrb[0].mxu0
        %460 = vmatprep.mubr.f32.mxu0 0.0
        %v461 = vand.u32 %v299, 4294901760
        %v462 = vsub.f32 %v299, %v461
        %v463 = vand.u32 %v462, 4294901760
        %v464 = vsub.f32 %v462, %v463
        %v465 = vand.u32 %v464, 4294901760
        %466 = vmatmul.mubr.f32.gmra.mrb[0].mxu0 %v465
        %v467 = vpop.f32.mrb[0].mxu0
        %v468 = vadd.f32 0.0, %v467
        %v469 = vpop.f32.mrb[0].mxu0
        %470 = vmatprep.mubr.f32.mxu0 0.0
        %v471 = vand.u32 %v302, 4294901760
        %v472 = vsub.f32 %v302, %v471
        %v473 = vand.u32 %v472, 4294901760
        %v474 = vsub.f32 %v472, %v473
        %v475 = vand.u32 %v474, 4294901760
        %476 = vmatmul.mubr.f32.gmra.mrb[0].mxu0 %v475
        %v477 = vpop.f32.mrb[0].mxu0
        %v478 = vadd.f32 0.0, %v477
        %v479 = vpop.f32.mrb[0].mxu0
        %480 = vmatprep.mubr.f32.mxu0 0.0
        %v481 = vand.u32 %v305, 4294901760
        %v482 = vsub.f32 %v305, %v481
        %v483 = vand.u32 %v482, 4294901760
        %v484 = vsub.f32 %v482, %v483
        %v485 = vand.u32 %v484, 4294901760
        %486 = vmatmul.mubr.f32.gmra.mrb[0].mxu0 %v485
        %v487 = vpop.f32.mrb[0].mxu0
        %v488 = vadd.f32 0.0, %v487
        %v489 = vpop.f32.mrb[0].mxu0
        %490 = vmatprep.mubr.f32.mxu0 0.0
        %v491 = vand.u32 %v308, 4294901760
        %v492 = vsub.f32 %v308, %v491
        %v493 = vand.u32 %v492, 4294901760
        %v494 = vsub.f32 %v492, %v493
        %v495 = vand.u32 %v494, 4294901760
        %496 = vmatmul.mubr.f32.gmra.mrb[0].mxu0 %v495
        %v497 = vpop.f32.mrb[0].mxu0
        %v498 = vadd.f32 0.0, %v497
        %v499 = vpop.f32.mrb[0].mxu0
        %500 = vmatprep.mubr.f32.mxu0 0.0
        %v501 = vand.u32 %v311, 4294901760
        %v502 = vsub.f32 %v311, %v501
        %v503 = vand.u32 %v502, 4294901760
        %v504 = vsub.f32 %v502, %v503
        %v505 = vand.u32 %v504, 4294901760
        %506 = vmatmul.mubr.f32.gmra.mrb[0].mxu0 %v505
        %v507 = vpop.f32.mrb[0].mxu0
        %v508 = vadd.f32 0.0, %v507
        %v509 = vpop.f32.mrb[0].mxu0
        %510 = vmatprep.mubr.f32.mxu0 0.0
        %v511 = vand.u32 %v314, 4294901760
        %v512 = vsub.f32 %v314, %v511
        %v513 = vand.u32 %v512, 4294901760
        %v514 = vsub.f32 %v512, %v513
        %v515 = vand.u32 %v514, 4294901760
        %516 = vmatmul.mubr.f32.gmra.mrb[0].mxu0 %v515
        %v517 = vpop.f32.mrb[0].mxu0
        %v518 = vadd.f32 0.0, %v517
        %v519 = vpop.f32.mrb[0].mxu0
        %520 = vmatprep.mubr.f32.mxu0 0.0
        %v521 = vand.u32 %v317, 4294901760
        %v522 = vsub.f32 %v317, %v521
        %v523 = vand.u32 %v522, 4294901760
        %v524 = vsub.f32 %v522, %v523
        %v525 = vand.u32 %v524, 4294901760
        %526 = vmatmul.mubr.f32.gmra.mrb[0].mxu0 %v525
        %v527 = vpop.f32.mrb[0].mxu0
        %v528 = vadd.f32 0.0, %v527
        %v529 = vpop.f32.mrb[0].mxu0
        %530 = vmatprep.mubr.f32.mxu0 0.0
        %v531 = vand.u32 %v320, 4294901760
        %v532 = vsub.f32 %v320, %v531
        %v533 = vand.u32 %v532, 4294901760
        %v534 = vsub.f32 %v532, %v533
        %v535 = vand.u32 %v534, 4294901760
        %536 = vmatmul.mubr.f32.gmra.mrb[0].mxu0 %v535
        %v537 = vpop.f32.mrb[0].mxu0
        %v538 = vadd.f32 0.0, %v537
        %v539 = vpop.f32.mrb[0].mxu0
        %540 = vmatprep.mubr.f32.mxu0 0.0
        %v541 = vand.u32 %v323, 4294901760
        %v542 = vsub.f32 %v323, %v541
        %v543 = vand.u32 %v542, 4294901760
        %v544 = vsub.f32 %v542, %v543
        %v545 = vand.u32 %v544, 4294901760
        %546 = vmatmul.mubr.f32.gmra.mrb[0].mxu0 %v545
        %v547 = vpop.f32.mrb[0].mxu0
        %v548 = vadd.f32 0.0, %v547
        %v549 = vpop.f32.mrb[0].mxu0
        %550 = vdwg.mxu0
        %551 = vmatprep.subr.mxu0 0.0
        %v552 = vand.u32 %v275, 4294901760
        %v553 = vsub.f32 %v275, %v552
        %v554 = vand.u32 %v553, 4294901760
        %v555 = vsub.f32 %v553, %v554
        %v556 = vand.u32 %v555, 4294901760
        %557 = vmatpush1.msra.mxu0 %v556
        %558 = vmatprep.subr.mxu0 0.0
        %559 = vmatpush1.msra.mxu0 0.0
        %560 = vmatprep.subr.mxu0 0.0
        %561 = vmatpush1.msra.mxu0 0.0
        %562 = vmatprep.subr.mxu0 0.0
        %563 = vmatpush1.msra.mxu0 0.0
        %564 = vmatprep.subr.mxu0 0.0
        %565 = vmatpush1.msra.mxu0 0.0
        %566 = vmatprep.subr.mxu0 0.0
        %567 = vmatpush1.msra.mxu0 0.0
        %568 = vmatprep.subr.mxu0 0.0
        %569 = vmatpush1.msra.mxu0 0.0
        %570 = vmatprep.subr.mxu0 0.0
        %571 = vmatpush1.msra.mxu0 0.0
        %572 = vmatprep.subr.mxu0 0.0
        %573 = vmatpush1.msra.mxu0 0.0
        %574 = vmatprep.subr.mxu0 0.0
        %575 = vmatpush1.msra.mxu0 0.0
        %576 = vmatprep.subr.mxu0 0.0
        %577 = vmatpush1.msra.mxu0 0.0
        %578 = vmatprep.subr.mxu0 0.0
        %579 = vmatpush1.msra.mxu0 0.0
        %580 = vmatprep.subr.mxu0 0.0
        %581 = vmatpush1.msra.mxu0 0.0
        %582 = vmatprep.subr.mxu0 0.0
        %583 = vmatpush1.msra.mxu0 0.0
        %584 = vmatprep.subr.mxu0 0.0
        %585 = vmatpush1.msra.mxu0 0.0
        %586 = vmatprep.subr.mxu0 0.0
        %587 = vmatpush1.msra.mxu0 0.0
        %588 = vmatprep.subr.mxu0 0.0
        %589 = vmatpush1.msra.mxu0 0.0
        %590 = vmatprep.subr.mxu0 0.0
        %591 = vmatpush1.msra.mxu0 0.0
        %592 = vmatprep.subr.mxu0 0.0
        %593 = vmatpush1.msra.mxu0 0.0
        %594 = vmatprep.subr.mxu0 0.0
        %595 = vmatpush1.msra.mxu0 0.0
        %596 = vmatprep.subr.mxu0 0.0
        %597 = vmatpush1.msra.mxu0 0.0
        %598 = vmatprep.subr.mxu0 0.0
        %599 = vmatpush1.msra.mxu0 0.0
        %600 = vmatprep.subr.mxu0 0.0
        %601 = vmatpush1.msra.mxu0 0.0
        %602 = vmatprep.subr.mxu0 0.0
        %603 = vmatpush1.msra.mxu0 0.0
        %604 = vmatprep.subr.mxu0 0.0
        %605 = vmatpush1.msra.mxu0 0.0
        %606 = vmatprep.subr.mxu0 0.0
        %607 = vmatpush1.msra.mxu0 0.0
        %608 = vmatprep.subr.mxu0 0.0
        %609 = vmatpush1.msra.mxu0 0.0
        %610 = vmatprep.subr.mxu0 0.0
        %611 = vmatpush1.msra.mxu0 0.0
        %612 = vmatprep.subr.mxu0 0.0
        %613 = vmatpush1.msra.mxu0 0.0
        %614 = vmatprep.subr.mxu0 0.0
        %615 = vmatpush1.msra.mxu0 0.0
        %616 = vmatprep.subr.mxu0 0.0
        %617 = vmatpush1.msra.mxu0 0.0
        %618 = vmatprep.subr.mxu0 0.0
        %619 = vmatpush1.msra.mxu0 0.0
        %620 = vmatprep.mubr.f32.mxu0 0.0
        %v621 = vand.u32 %v278, 4294901760
        %622 = vmatmul.mubr.f32.gmra.mrb[0].mxu0 %v621
        %v623 = vpop.f32.mrb[0].mxu0
        %v624 = vadd.f32 %v398, %v623
        %v625 = vpop.f32.mrb[0].mxu0
        %626 = vmatprep.mubr.f32.mxu0 0.0
        %v627 = vand.u32 %v281, 4294901760
        %628 = vmatmul.mubr.f32.gmra.mrb[0].mxu0 %v627
        %v629 = vpop.f32.mrb[0].mxu0
        %v630 = vadd.f32 %v408, %v629
        %v631 = vpop.f32.mrb[0].mxu0
        %632 = vmatprep.mubr.f32.mxu0 0.0
        %v633 = vand.u32 %v284, 4294901760
        %634 = vmatmul.mubr.f32.gmra.mrb[0].mxu0 %v633
        %v635 = vpop.f32.mrb[0].mxu0
        %v636 = vadd.f32 %v418, %v635
        %v637 = vpop.f32.mrb[0].mxu0
        %638 = vmatprep.mubr.f32.mxu0 0.0
        %v639 = vand.u32 %v287, 4294901760
        %640 = vmatmul.mubr.f32.gmra.mrb[0].mxu0 %v639
        %v641 = vpop.f32.mrb[0].mxu0
        %v642 = vadd.f32 %v428, %v641
        %v643 = vpop.f32.mrb[0].mxu0
        %644 = vmatprep.mubr.f32.mxu0 0.0
        %v645 = vand.u32 %v290, 4294901760
        %646 = vmatmul.mubr.f32.gmra.mrb[0].mxu0 %v645
        %v647 = vpop.f32.mrb[0].mxu0
        %v648 = vadd.f32 %v438, %v647
        %v649 = vpop.f32.mrb[0].mxu0
        %650 = vmatprep.mubr.f32.mxu0 0.0
        %v651 = vand.u32 %v293, 4294901760
        %652 = vmatmul.mubr.f32.gmra.mrb[0].mxu0 %v651
        %v653 = vpop.f32.mrb[0].mxu0
        %v654 = vadd.f32 %v448, %v653
        %v655 = vpop.f32.mrb[0].mxu0
        %656 = vmatprep.mubr.f32.mxu0 0.0
        %v657 = vand.u32 %v296, 4294901760
        %658 = vmatmul.mubr.f32.gmra.mrb[0].mxu0 %v657
        %v659 = vpop.f32.mrb[0].mxu0
        %v660 = vadd.f32 %v458, %v659
        %v661 = vpop.f32.mrb[0].mxu0
        %662 = vmatprep.mubr.f32.mxu0 0.0
        %v663 = vand.u32 %v299, 4294901760
        %664 = vmatmul.mubr.f32.gmra.mrb[0].mxu0 %v663
        %v665 = vpop.f32.mrb[0].mxu0
        %v666 = vadd.f32 %v468, %v665
        %v667 = vpop.f32.mrb[0].mxu0
        %668 = vmatprep.mubr.f32.mxu0 0.0
        %v669 = vand.u32 %v302, 4294901760
        %670 = vmatmul.mubr.f32.gmra.mrb[0].mxu0 %v669
        %v671 = vpop.f32.mrb[0].mxu0
        %v672 = vadd.f32 %v478, %v671
        %v673 = vpop.f32.mrb[0].mxu0
        %674 = vmatprep.mubr.f32.mxu0 0.0
        %v675 = vand.u32 %v305, 4294901760
        %676 = vmatmul.mubr.f32.gmra.mrb[0].mxu0 %v675
        %v677 = vpop.f32.mrb[0].mxu0
        %v678 = vadd.f32 %v488, %v677
        %v679 = vpop.f32.mrb[0].mxu0
        %680 = vmatprep.mubr.f32.mxu0 0.0
        %v681 = vand.u32 %v308, 4294901760
        %682 = vmatmul.mubr.f32.gmra.mrb[0].mxu0 %v681
        %v683 = vpop.f32.mrb[0].mxu0
        %v684 = vadd.f32 %v498, %v683
        %v685 = vpop.f32.mrb[0].mxu0
        %686 = vmatprep.mubr.f32.mxu0 0.0
        %v687 = vand.u32 %v311, 4294901760
        %688 = vmatmul.mubr.f32.gmra.mrb[0].mxu0 %v687
        %v689 = vpop.f32.mrb[0].mxu0
        %v690 = vadd.f32 %v508, %v689
        %v691 = vpop.f32.mrb[0].mxu0
        %692 = vmatprep.mubr.f32.mxu0 0.0
        %v693 = vand.u32 %v314, 4294901760
        %694 = vmatmul.mubr.f32.gmra.mrb[0].mxu0 %v693
        %v695 = vpop.f32.mrb[0].mxu0
        %v696 = vadd.f32 %v518, %v695
        %v697 = vpop.f32.mrb[0].mxu0
        %698 = vmatprep.mubr.f32.mxu0 0.0
        %v699 = vand.u32 %v317, 4294901760
        %700 = vmatmul.mubr.f32.gmra.mrb[0].mxu0 %v699
        %v701 = vpop.f32.mrb[0].mxu0
        %v702 = vadd.f32 %v528, %v701
        %v703 = vpop.f32.mrb[0].mxu0
        %704 = vmatprep.mubr.f32.mxu0 0.0
        %v705 = vand.u32 %v320, 4294901760
        %706 = vmatmul.mubr.f32.gmra.mrb[0].mxu0 %v705
        %v707 = vpop.f32.mrb[0].mxu0
        %v708 = vadd.f32 %v538, %v707
        %v709 = vpop.f32.mrb[0].mxu0
        %710 = vmatprep.mubr.f32.mxu0 0.0
        %v711 = vand.u32 %v323, 4294901760
        %712 = vmatmul.mubr.f32.gmra.mrb[0].mxu0 %v711
        %v713 = vpop.f32.mrb[0].mxu0
        %v714 = vadd.f32 %v548, %v713
        %v715 = vpop.f32.mrb[0].mxu0
        %716 = vdwg.mxu0
        %717 = vmatprep.subr.mxu0 0.0
        %v718 = vand.u32 %v275, 4294901760
        %v719 = vsub.f32 %v275, %v718
        %720 = vmatpush1.msra.mxu0 %v719
        %721 = vmatprep.subr.mxu0 0.0
        %722 = vmatpush1.msra.mxu0 0.0
        %723 = vmatprep.subr.mxu0 0.0
        %724 = vmatpush1.msra.mxu0 0.0
        %725 = vmatprep.subr.mxu0 0.0
        %726 = vmatpush1.msra.mxu0 0.0
        %727 = vmatprep.subr.mxu0 0.0
        %728 = vmatpush1.msra.mxu0 0.0
        %729 = vmatprep.subr.mxu0 0.0
        %730 = vmatpush1.msra.mxu0 0.0
        %731 = vmatprep.subr.mxu0 0.0
        %732 = vmatpush1.msra.mxu0 0.0
        %733 = vmatprep.subr.mxu0 0.0
        %734 = vmatpush1.msra.mxu0 0.0
        %735 = vmatprep.subr.mxu0 0.0
        %736 = vmatpush1.msra.mxu0 0.0
        %737 = vmatprep.subr.mxu0 0.0
        %738 = vmatpush1.msra.mxu0 0.0
        %739 = vmatprep.subr.mxu0 0.0
        %740 = vmatpush1.msra.mxu0 0.0
        %741 = vmatprep.subr.mxu0 0.0
        %742 = vmatpush1.msra.mxu0 0.0
        %743 = vmatprep.subr.mxu0 0.0
        %744 = vmatpush1.msra.mxu0 0.0
        %745 = vmatprep.subr.mxu0 0.0
        %746 = vmatpush1.msra.mxu0 0.0
        %747 = vmatprep.subr.mxu0 0.0
        %748 = vmatpush1.msra.mxu0 0.0
        %749 = vmatprep.subr.mxu0 0.0
        %750 = vmatpush1.msra.mxu0 0.0
        %751 = vmatprep.subr.mxu0 0.0
        %752 = vmatpush1.msra.mxu0 0.0
        %753 = vmatprep.subr.mxu0 0.0
        %754 = vmatpush1.msra.mxu0 0.0
        %755 = vmatprep.subr.mxu0 0.0
        %756 = vmatpush1.msra.mxu0 0.0
        %757 = vmatprep.subr.mxu0 0.0
        %758 = vmatpush1.msra.mxu0 0.0
        %759 = vmatprep.subr.mxu0 0.0
        %760 = vmatpush1.msra.mxu0 0.0
        %761 = vmatprep.subr.mxu0 0.0
        %762 = vmatpush1.msra.mxu0 0.0
        %763 = vmatprep.subr.mxu0 0.0
        %764 = vmatpush1.msra.mxu0 0.0
        %765 = vmatprep.subr.mxu0 0.0
        %766 = vmatpush1.msra.mxu0 0.0
        %767 = vmatprep.subr.mxu0 0.0
        %768 = vmatpush1.msra.mxu0 0.0
        %769 = vmatprep.subr.mxu0 0.0
        %770 = vmatpush1.msra.mxu0 0.0
        %771 = vmatprep.subr.mxu0 0.0
        %772 = vmatpush1.msra.mxu0 0.0
        %773 = vmatprep.subr.mxu0 0.0
        %774 = vmatpush1.msra.mxu0 0.0
        %775 = vmatprep.subr.mxu0 0.0
        %776 = vmatpush1.msra.mxu0 0.0
        %777 = vmatprep.subr.mxu0 0.0
        %778 = vmatpush1.msra.mxu0 0.0
        %779 = vmatprep.subr.mxu0 0.0
        %780 = vmatpush1.msra.mxu0 0.0
        %781 = vmatprep.subr.mxu0 0.0
        %782 = vmatpush1.msra.mxu0 0.0
        %783 = vmatprep.mubr.f32.mxu0 0.0
        %v784 = vand.u32 %v278, 4294901760
        %v785 = vsub.f32 %v278, %v784
        %786 = vmatmul.mubr.f32.gmra.mrb[0].mxu0 %v785
        %v787 = vpop.f32.mrb[0].mxu0
        %v788 = vadd.f32 %v624, %v787
        %v789 = vpop.f32.mrb[0].mxu0
        %790 = vmatprep.mubr.f32.mxu0 0.0
        %v791 = vand.u32 %v281, 4294901760
        %v792 = vsub.f32 %v281, %v791
        %793 = vmatmul.mubr.f32.gmra.mrb[0].mxu0 %v792
        %v794 = vpop.f32.mrb[0].mxu0
        %v795 = vadd.f32 %v630, %v794
        %v796 = vpop.f32.mrb[0].mxu0
        %797 = vmatprep.mubr.f32.mxu0 0.0
        %v798 = vand.u32 %v284, 4294901760
        %v799 = vsub.f32 %v284, %v798
        %800 = vmatmul.mubr.f32.gmra.mrb[0].mxu0 %v799
        %v801 = vpop.f32.mrb[0].mxu0
        %v802 = vadd.f32 %v636, %v801
        %v803 = vpop.f32.mrb[0].mxu0
        %804 = vmatprep.mubr.f32.mxu0 0.0
        %v805 = vand.u32 %v287, 4294901760
        %v806 = vsub.f32 %v287, %v805
        %807 = vmatmul.mubr.f32.gmra.mrb[0].mxu0 %v806
        %v808 = vpop.f32.mrb[0].mxu0
        %v809 = vadd.f32 %v642, %v808
        %v810 = vpop.f32.mrb[0].mxu0
        %811 = vmatprep.mubr.f32.mxu0 0.0
        %v812 = vand.u32 %v290, 4294901760
        %v813 = vsub.f32 %v290, %v812
        %814 = vmatmul.mubr.f32.gmra.mrb[0].mxu0 %v813
        %v815 = vpop.f32.mrb[0].mxu0
        %v816 = vadd.f32 %v648, %v815
        %v817 = vpop.f32.mrb[0].mxu0
        %818 = vmatprep.mubr.f32.mxu0 0.0
        %v819 = vand.u32 %v293, 4294901760
        %v820 = vsub.f32 %v293, %v819
        %821 = vmatmul.mubr.f32.gmra.mrb[0].mxu0 %v820
        %v822 = vpop.f32.mrb[0].mxu0
        %v823 = vadd.f32 %v654, %v822
        %v824 = vpop.f32.mrb[0].mxu0
        %825 = vmatprep.mubr.f32.mxu0 0.0
        %v826 = vand.u32 %v296, 4294901760
        %v827 = vsub.f32 %v296, %v826
        %828 = vmatmul.mubr.f32.gmra.mrb[0].mxu0 %v827
        %v829 = vpop.f32.mrb[0].mxu0
        %v830 = vadd.f32 %v660, %v829
        %v831 = vpop.f32.mrb[0].mxu0
        %832 = vmatprep.mubr.f32.mxu0 0.0
        %v833 = vand.u32 %v299, 4294901760
        %v834 = vsub.f32 %v299, %v833
        %835 = vmatmul.mubr.f32.gmra.mrb[0].mxu0 %v834
        %v836 = vpop.f32.mrb[0].mxu0
        %v837 = vadd.f32 %v666, %v836
        %v838 = vpop.f32.mrb[0].mxu0
        %839 = vmatprep.mubr.f32.mxu0 0.0
        %v840 = vand.u32 %v302, 4294901760
        %v841 = vsub.f32 %v302, %v840
        %842 = vmatmul.mubr.f32.gmra.mrb[0].mxu0 %v841
        %v843 = vpop.f32.mrb[0].mxu0
        %v844 = vadd.f32 %v672, %v843
        %v845 = vpop.f32.mrb[0].mxu0
        %846 = vmatprep.mubr.f32.mxu0 0.0
        %v847 = vand.u32 %v305, 4294901760
        %v848 = vsub.f32 %v305, %v847
        %849 = vmatmul.mubr.f32.gmra.mrb[0].mxu0 %v848
        %v850 = vpop.f32.mrb[0].mxu0
        %v851 = vadd.f32 %v678, %v850
        %v852 = vpop.f32.mrb[0].mxu0
        %853 = vmatprep.mubr.f32.mxu0 0.0
        %v854 = vand.u32 %v308, 4294901760
        %v855 = vsub.f32 %v308, %v854
        %856 = vmatmul.mubr.f32.gmra.mrb[0].mxu0 %v855
        %v857 = vpop.f32.mrb[0].mxu0
        %v858 = vadd.f32 %v684, %v857
        %v859 = vpop.f32.mrb[0].mxu0
        %860 = vmatprep.mubr.f32.mxu0 0.0
        %v861 = vand.u32 %v311, 4294901760
        %v862 = vsub.f32 %v311, %v861
        %863 = vmatmul.mubr.f32.gmra.mrb[0].mxu0 %v862
        %v864 = vpop.f32.mrb[0].mxu0
        %v865 = vadd.f32 %v690, %v864
        %v866 = vpop.f32.mrb[0].mxu0
        %867 = vmatprep.mubr.f32.mxu0 0.0
        %v868 = vand.u32 %v314, 4294901760
        %v869 = vsub.f32 %v314, %v868
        %870 = vmatmul.mubr.f32.gmra.mrb[0].mxu0 %v869
        %v871 = vpop.f32.mrb[0].mxu0
        %v872 = vadd.f32 %v696, %v871
        %v873 = vpop.f32.mrb[0].mxu0
        %874 = vmatprep.mubr.f32.mxu0 0.0
        %v875 = vand.u32 %v317, 4294901760
        %v876 = vsub.f32 %v317, %v875
        %877 = vmatmul.mubr.f32.gmra.mrb[0].mxu0 %v876
        %v878 = vpop.f32.mrb[0].mxu0
        %v879 = vadd.f32 %v702, %v878
        %v880 = vpop.f32.mrb[0].mxu0
        %881 = vmatprep.mubr.f32.mxu0 0.0
        %v882 = vand.u32 %v320, 4294901760
        %v883 = vsub.f32 %v320, %v882
        %884 = vmatmul.mubr.f32.gmra.mrb[0].mxu0 %v883
        %v885 = vpop.f32.mrb[0].mxu0
        %v886 = vadd.f32 %v708, %v885
        %v887 = vpop.f32.mrb[0].mxu0
        %888 = vmatprep.mubr.f32.mxu0 0.0
        %v889 = vand.u32 %v323, 4294901760
        %v890 = vsub.f32 %v323, %v889
        %891 = vmatmul.mubr.f32.gmra.mrb[0].mxu0 %v890
        %v892 = vpop.f32.mrb[0].mxu0
        %v893 = vadd.f32 %v714, %v892
        %v894 = vpop.f32.mrb[0].mxu0
        %895 = vdwg.mxu0
        %896 = vmatprep.subr.mxu0 0.0
        %v897 = vand.u32 %v275, 4294901760
        %898 = vmatpush1.msra.mxu0 %v897
        %899 = vmatprep.subr.mxu0 0.0
        %900 = vmatpush1.msra.mxu0 0.0
        %901 = vmatprep.subr.mxu0 0.0
        %902 = vmatpush1.msra.mxu0 0.0
        %903 = vmatprep.subr.mxu0 0.0
        %904 = vmatpush1.msra.mxu0 0.0
        %905 = vmatprep.subr.mxu0 0.0
        %906 = vmatpush1.msra.mxu0 0.0
        %907 = vmatprep.subr.mxu0 0.0
        %908 = vmatpush1.msra.mxu0 0.0
        %909 = vmatprep.subr.mxu0 0.0
        %910 = vmatpush1.msra.mxu0 0.0
        %911 = vmatprep.subr.mxu0 0.0
        %912 = vmatpush1.msra.mxu0 0.0
        %913 = vmatprep.subr.mxu0 0.0
        %914 = vmatpush1.msra.mxu0 0.0
        %915 = vmatprep.subr.mxu0 0.0
        %916 = vmatpush1.msra.mxu0 0.0
        %917 = vmatprep.subr.mxu0 0.0
        %918 = vmatpush1.msra.mxu0 0.0
        %919 = vmatprep.subr.mxu0 0.0
        %920 = vmatpush1.msra.mxu0 0.0
        %921 = vmatprep.subr.mxu0 0.0
        %922 = vmatpush1.msra.mxu0 0.0
        %923 = vmatprep.subr.mxu0 0.0
        %924 = vmatpush1.msra.mxu0 0.0
        %925 = vmatprep.subr.mxu0 0.0
        %926 = vmatpush1.msra.mxu0 0.0
        %927 = vmatprep.subr.mxu0 0.0
        %928 = vmatpush1.msra.mxu0 0.0
        %929 = vmatprep.subr.mxu0 0.0
        %930 = vmatpush1.msra.mxu0 0.0
        %931 = vmatprep.subr.mxu0 0.0
        %932 = vmatpush1.msra.mxu0 0.0
        %933 = vmatprep.subr.mxu0 0.0
        %934 = vmatpush1.msra.mxu0 0.0
        %935 = vmatprep.subr.mxu0 0.0
        %936 = vmatpush1.msra.mxu0 0.0
        %937 = vmatprep.subr.mxu0 0.0
        %938 = vmatpush1.msra.mxu0 0.0
        %939 = vmatprep.subr.mxu0 0.0
        %940 = vmatpush1.msra.mxu0 0.0
        %941 = vmatprep.subr.mxu0 0.0
        %942 = vmatpush1.msra.mxu0 0.0
        %943 = vmatprep.subr.mxu0 0.0
        %944 = vmatpush1.msra.mxu0 0.0
        %945 = vmatprep.subr.mxu0 0.0
        %946 = vmatpush1.msra.mxu0 0.0
        %947 = vmatprep.subr.mxu0 0.0
        %948 = vmatpush1.msra.mxu0 0.0
        %949 = vmatprep.subr.mxu0 0.0
        %950 = vmatpush1.msra.mxu0 0.0
        %951 = vmatprep.subr.mxu0 0.0
        %952 = vmatpush1.msra.mxu0 0.0
        %953 = vmatprep.subr.mxu0 0.0
        %954 = vmatpush1.msra.mxu0 0.0
        %955 = vmatprep.subr.mxu0 0.0
        %956 = vmatpush1.msra.mxu0 0.0
        %957 = vmatprep.subr.mxu0 0.0
        %958 = vmatpush1.msra.mxu0 0.0
        %959 = vmatprep.subr.mxu0 0.0
        %960 = vmatpush1.msra.mxu0 0.0
        %961 = vmatprep.mubr.f32.mxu0 0.0
        %v962 = vand.u32 %v278, 4294901760
        %v963 = vsub.f32 %v278, %v962
        %v964 = vand.u32 %v963, 4294901760
        %965 = vmatmul.mubr.f32.gmra.mrb[0].mxu0 %v964
        %v966 = vpop.f32.mrb[0].mxu0
        %v967 = vadd.f32 %v788, %v966
        %v968 = vpop.f32.mrb[0].mxu0
        %969 = vmatprep.mubr.f32.mxu0 0.0
        %v970 = vand.u32 %v281, 4294901760
        %v971 = vsub.f32 %v281, %v970
        %v972 = vand.u32 %v971, 4294901760
        %973 = vmatmul.mubr.f32.gmra.mrb[0].mxu0 %v972
        %v974 = vpop.f32.mrb[0].mxu0
        %v975 = vadd.f32 %v795, %v974
        %v976 = vpop.f32.mrb[0].mxu0
        %977 = vmatprep.mubr.f32.mxu0 0.0
        %v978 = vand.u32 %v284, 4294901760
        %v979 = vsub.f32 %v284, %v978
        %v980 = vand.u32 %v979, 4294901760
        %981 = vmatmul.mubr.f32.gmra.mrb[0].mxu0 %v980
        %v982 = vpop.f32.mrb[0].mxu0
        %v983 = vadd.f32 %v802, %v982
        %v984 = vpop.f32.mrb[0].mxu0
        %985 = vmatprep.mubr.f32.mxu0 0.0
        %v986 = vand.u32 %v287, 4294901760
        %v987 = vsub.f32 %v287, %v986
        %v988 = vand.u32 %v987, 4294901760
        %989 = vmatmul.mubr.f32.gmra.mrb[0].mxu0 %v988
        %v990 = vpop.f32.mrb[0].mxu0
        %v991 = vadd.f32 %v809, %v990
        %v992 = vpop.f32.mrb[0].mxu0
        %993 = vmatprep.mubr.f32.mxu0 0.0
        %v994 = vand.u32 %v290, 4294901760
        %v995 = vsub.f32 %v290, %v994
        %v996 = vand.u32 %v995, 4294901760
        %997 = vmatmul.mubr.f32.gmra.mrb[0].mxu0 %v996
        %v998 = vpop.f32.mrb[0].mxu0
        %v999 = vadd.f32 %v816, %v998
        %v1000 = vpop.f32.mrb[0].mxu0
        %1001 = vmatprep.mubr.f32.mxu0 0.0
        %v1002 = vand.u32 %v293, 4294901760
        %v1003 = vsub.f32 %v293, %v1002
        %v1004 = vand.u32 %v1003, 4294901760
        %1005 = vmatmul.mubr.f32.gmra.mrb[0].mxu0 %v1004
        %v1006 = vpop.f32.mrb[0].mxu0
        %v1007 = vadd.f32 %v823, %v1006
        %v1008 = vpop.f32.mrb[0].mxu0
        %1009 = vmatprep.mubr.f32.mxu0 0.0
        %v1010 = vand.u32 %v296, 4294901760
        %v1011 = vsub.f32 %v296, %v1010
        %v1012 = vand.u32 %v1011, 4294901760
        %1013 = vmatmul.mubr.f32.gmra.mrb[0].mxu0 %v1012
        %v1014 = vpop.f32.mrb[0].mxu0
        %v1015 = vadd.f32 %v830, %v1014
        %v1016 = vpop.f32.mrb[0].mxu0
        %1017 = vmatprep.mubr.f32.mxu0 0.0
        %v1018 = vand.u32 %v299, 4294901760
        %v1019 = vsub.f32 %v299, %v1018
        %v1020 = vand.u32 %v1019, 4294901760
        %1021 = vmatmul.mubr.f32.gmra.mrb[0].mxu0 %v1020
        %v1022 = vpop.f32.mrb[0].mxu0
        %v1023 = vadd.f32 %v837, %v1022
        %v1024 = vpop.f32.mrb[0].mxu0
        %1025 = vmatprep.mubr.f32.mxu0 0.0
        %v1026 = vand.u32 %v302, 4294901760
        %v1027 = vsub.f32 %v302, %v1026
        %v1028 = vand.u32 %v1027, 4294901760
        %1029 = vmatmul.mubr.f32.gmra.mrb[0].mxu0 %v1028
        %v1030 = vpop.f32.mrb[0].mxu0
        %v1031 = vadd.f32 %v844, %v1030
        %v1032 = vpop.f32.mrb[0].mxu0
        %1033 = vmatprep.mubr.f32.mxu0 0.0
        %v1034 = vand.u32 %v305, 4294901760
        %v1035 = vsub.f32 %v305, %v1034
        %v1036 = vand.u32 %v1035, 4294901760
        %1037 = vmatmul.mubr.f32.gmra.mrb[0].mxu0 %v1036
        %v1038 = vpop.f32.mrb[0].mxu0
        %v1039 = vadd.f32 %v851, %v1038
        %v1040 = vpop.f32.mrb[0].mxu0
        %1041 = vmatprep.mubr.f32.mxu0 0.0
        %v1042 = vand.u32 %v308, 4294901760
        %v1043 = vsub.f32 %v308, %v1042
        %v1044 = vand.u32 %v1043, 4294901760
        %1045 = vmatmul.mubr.f32.gmra.mrb[0].mxu0 %v1044
        %v1046 = vpop.f32.mrb[0].mxu0
        %v1047 = vadd.f32 %v858, %v1046
        %v1048 = vpop.f32.mrb[0].mxu0
        %1049 = vmatprep.mubr.f32.mxu0 0.0
        %v1050 = vand.u32 %v311, 4294901760
        %v1051 = vsub.f32 %v311, %v1050
        %v1052 = vand.u32 %v1051, 4294901760
        %1053 = vmatmul.mubr.f32.gmra.mrb[0].mxu0 %v1052
        %v1054 = vpop.f32.mrb[0].mxu0
        %v1055 = vadd.f32 %v865, %v1054
        %v1056 = vpop.f32.mrb[0].mxu0
        %1057 = vmatprep.mubr.f32.mxu0 0.0
        %v1058 = vand.u32 %v314, 4294901760
        %v1059 = vsub.f32 %v314, %v1058
        %v1060 = vand.u32 %v1059, 4294901760
        %1061 = vmatmul.mubr.f32.gmra.mrb[0].mxu0 %v1060
        %v1062 = vpop.f32.mrb[0].mxu0
        %v1063 = vadd.f32 %v872, %v1062
        %v1064 = vpop.f32.mrb[0].mxu0
        %1065 = vmatprep.mubr.f32.mxu0 0.0
        %v1066 = vand.u32 %v317, 4294901760
        %v1067 = vsub.f32 %v317, %v1066
        %v1068 = vand.u32 %v1067, 4294901760
        %1069 = vmatmul.mubr.f32.gmra.mrb[0].mxu0 %v1068
        %v1070 = vpop.f32.mrb[0].mxu0
        %v1071 = vadd.f32 %v879, %v1070
        %v1072 = vpop.f32.mrb[0].mxu0
        %1073 = vmatprep.mubr.f32.mxu0 0.0
        %v1074 = vand.u32 %v320, 4294901760
        %v1075 = vsub.f32 %v320, %v1074
        %v1076 = vand.u32 %v1075, 4294901760
        %1077 = vmatmul.mubr.f32.gmra.mrb[0].mxu0 %v1076
        %v1078 = vpop.f32.mrb[0].mxu0
        %v1079 = vadd.f32 %v886, %v1078
        %v1080 = vpop.f32.mrb[0].mxu0
        %1081 = vmatprep.mubr.f32.mxu0 0.0
        %v1082 = vand.u32 %v323, 4294901760
        %v1083 = vsub.f32 %v323, %v1082
        %v1084 = vand.u32 %v1083, 4294901760
        %1085 = vmatmul.mubr.f32.gmra.mrb[0].mxu0 %v1084
        %v1086 = vpop.f32.mrb[0].mxu0
        %v1087 = vadd.f32 %v893, %v1086
        %v1088 = vpop.f32.mrb[0].mxu0
        %1089 = vdwg.mxu0
        %1090 = vmatprep.subr.mxu0 0.0
        %v1091 = vand.u32 %v275, 4294901760
        %v1092 = vsub.f32 %v275, %v1091
        %v1093 = vand.u32 %v1092, 4294901760
        %1094 = vmatpush1.msra.mxu0 %v1093
        %1095 = vmatprep.subr.mxu0 0.0
        %1096 = vmatpush1.msra.mxu0 0.0
        %1097 = vmatprep.subr.mxu0 0.0
        %1098 = vmatpush1.msra.mxu0 0.0
        %1099 = vmatprep.subr.mxu0 0.0
        %1100 = vmatpush1.msra.mxu0 0.0
        %1101 = vmatprep.subr.mxu0 0.0
        %1102 = vmatpush1.msra.mxu0 0.0
        %1103 = vmatprep.subr.mxu0 0.0
        %1104 = vmatpush1.msra.mxu0 0.0
        %1105 = vmatprep.subr.mxu0 0.0
        %1106 = vmatpush1.msra.mxu0 0.0
        %1107 = vmatprep.subr.mxu0 0.0
        %1108 = vmatpush1.msra.mxu0 0.0
        %1109 = vmatprep.subr.mxu0 0.0
        %1110 = vmatpush1.msra.mxu0 0.0
        %1111 = vmatprep.subr.mxu0 0.0
        %1112 = vmatpush1.msra.mxu0 0.0
        %1113 = vmatprep.subr.mxu0 0.0
        %1114 = vmatpush1.msra.mxu0 0.0
        %1115 = vmatprep.subr.mxu0 0.0
        %1116 = vmatpush1.msra.mxu0 0.0
        %1117 = vmatprep.subr.mxu0 0.0
        %1118 = vmatpush1.msra.mxu0 0.0
        %1119 = vmatprep.subr.mxu0 0.0
        %1120 = vmatpush1.msra.mxu0 0.0
        %1121 = vmatprep.subr.mxu0 0.0
        %1122 = vmatpush1.msra.mxu0 0.0
        %1123 = vmatprep.subr.mxu0 0.0
        %1124 = vmatpush1.msra.mxu0 0.0
        %1125 = vmatprep.subr.mxu0 0.0
        %1126 = vmatpush1.msra.mxu0 0.0
        %1127 = vmatprep.subr.mxu0 0.0
        %1128 = vmatpush1.msra.mxu0 0.0
        %1129 = vmatprep.subr.mxu0 0.0
        %1130 = vmatpush1.msra.mxu0 0.0
        %1131 = vmatprep.subr.mxu0 0.0
        %1132 = vmatpush1.msra.mxu0 0.0
        %1133 = vmatprep.subr.mxu0 0.0
        %1134 = vmatpush1.msra.mxu0 0.0
        %1135 = vmatprep.subr.mxu0 0.0
        %1136 = vmatpush1.msra.mxu0 0.0
        %1137 = vmatprep.subr.mxu0 0.0
        %1138 = vmatpush1.msra.mxu0 0.0
        %1139 = vmatprep.subr.mxu0 0.0
        %1140 = vmatpush1.msra.mxu0 0.0
        %1141 = vmatprep.subr.mxu0 0.0
        %1142 = vmatpush1.msra.mxu0 0.0
        %1143 = vmatprep.subr.mxu0 0.0
        %1144 = vmatpush1.msra.mxu0 0.0
        %1145 = vmatprep.subr.mxu0 0.0
        %1146 = vmatpush1.msra.mxu0 0.0
        %1147 = vmatprep.subr.mxu0 0.0
        %1148 = vmatpush1.msra.mxu0 0.0
        %1149 = vmatprep.subr.mxu0 0.0
        %1150 = vmatpush1.msra.mxu0 0.0
        %1151 = vmatprep.subr.mxu0 0.0
        %1152 = vmatpush1.msra.mxu0 0.0
        %1153 = vmatprep.subr.mxu0 0.0
        %1154 = vmatpush1.msra.mxu0 0.0
        %1155 = vmatprep.subr.mxu0 0.0
        %1156 = vmatpush1.msra.mxu0 0.0
        %1157 = vmatprep.mubr.f32.mxu0 0.0
        %v1158 = vand.u32 %v278, 4294901760
        %1159 = vmatmul.mubr.f32.gmra.mrb[0].mxu0 %v1158
        %v1160 = vpop.f32.mrb[0].mxu0
        %v1161 = vadd.f32 %v967, %v1160
        %v1162 = vpop.f32.mrb[0].mxu0
        %1163 = vmatprep.mubr.f32.mxu0 0.0
        %v1164 = vand.u32 %v281, 4294901760
        %1165 = vmatmul.mubr.f32.gmra.mrb[0].mxu0 %v1164
        %v1166 = vpop.f32.mrb[0].mxu0
        %v1167 = vadd.f32 %v975, %v1166
        %v1168 = vpop.f32.mrb[0].mxu0
        %1169 = vmatprep.mubr.f32.mxu0 0.0
        %v1170 = vand.u32 %v284, 4294901760
        %1171 = vmatmul.mubr.f32.gmra.mrb[0].mxu0 %v1170
        %v1172 = vpop.f32.mrb[0].mxu0
        %v1173 = vadd.f32 %v983, %v1172
        %v1174 = vpop.f32.mrb[0].mxu0
        %1175 = vmatprep.mubr.f32.mxu0 0.0
        %v1176 = vand.u32 %v287, 4294901760
        %1177 = vmatmul.mubr.f32.gmra.mrb[0].mxu0 %v1176
        %v1178 = vpop.f32.mrb[0].mxu0
        %v1179 = vadd.f32 %v991, %v1178
        %v1180 = vpop.f32.mrb[0].mxu0
        %1181 = vmatprep.mubr.f32.mxu0 0.0
        %v1182 = vand.u32 %v290, 4294901760
        %1183 = vmatmul.mubr.f32.gmra.mrb[0].mxu0 %v1182
        %v1184 = vpop.f32.mrb[0].mxu0
        %v1185 = vadd.f32 %v999, %v1184
        %v1186 = vpop.f32.mrb[0].mxu0
        %1187 = vmatprep.mubr.f32.mxu0 0.0
        %v1188 = vand.u32 %v293, 4294901760
        %1189 = vmatmul.mubr.f32.gmra.mrb[0].mxu0 %v1188
        %v1190 = vpop.f32.mrb[0].mxu0
        %v1191 = vadd.f32 %v1007, %v1190
        %v1192 = vpop.f32.mrb[0].mxu0
        %1193 = vmatprep.mubr.f32.mxu0 0.0
        %v1194 = vand.u32 %v296, 4294901760
        %1195 = vmatmul.mubr.f32.gmra.mrb[0].mxu0 %v1194
        %v1196 = vpop.f32.mrb[0].mxu0
        %v1197 = vadd.f32 %v1015, %v1196
        %v1198 = vpop.f32.mrb[0].mxu0
        %1199 = vmatprep.mubr.f32.mxu0 0.0
        %v1200 = vand.u32 %v299, 4294901760
        %1201 = vmatmul.mubr.f32.gmra.mrb[0].mxu0 %v1200
        %v1202 = vpop.f32.mrb[0].mxu0
        %v1203 = vadd.f32 %v1023, %v1202
        %v1204 = vpop.f32.mrb[0].mxu0
        %1205 = vmatprep.mubr.f32.mxu0 0.0
        %v1206 = vand.u32 %v302, 4294901760
        %1207 = vmatmul.mubr.f32.gmra.mrb[0].mxu0 %v1206
        %v1208 = vpop.f32.mrb[0].mxu0
        %v1209 = vadd.f32 %v1031, %v1208
        %v1210 = vpop.f32.mrb[0].mxu0
        %1211 = vmatprep.mubr.f32.mxu0 0.0
        %v1212 = vand.u32 %v305, 4294901760
        %1213 = vmatmul.mubr.f32.gmra.mrb[0].mxu0 %v1212
        %v1214 = vpop.f32.mrb[0].mxu0
        %v1215 = vadd.f32 %v1039, %v1214
        %v1216 = vpop.f32.mrb[0].mxu0
        %1217 = vmatprep.mubr.f32.mxu0 0.0
        %v1218 = vand.u32 %v308, 4294901760
        %1219 = vmatmul.mubr.f32.gmra.mrb[0].mxu0 %v1218
        %v1220 = vpop.f32.mrb[0].mxu0
        %v1221 = vadd.f32 %v1047, %v1220
        %v1222 = vpop.f32.mrb[0].mxu0
        %1223 = vmatprep.mubr.f32.mxu0 0.0
        %v1224 = vand.u32 %v311, 4294901760
        %1225 = vmatmul.mubr.f32.gmra.mrb[0].mxu0 %v1224
        %v1226 = vpop.f32.mrb[0].mxu0
        %v1227 = vadd.f32 %v1055, %v1226
        %v1228 = vpop.f32.mrb[0].mxu0
        %1229 = vmatprep.mubr.f32.mxu0 0.0
        %v1230 = vand.u32 %v314, 4294901760
        %1231 = vmatmul.mubr.f32.gmra.mrb[0].mxu0 %v1230
        %v1232 = vpop.f32.mrb[0].mxu0
        %v1233 = vadd.f32 %v1063, %v1232
        %v1234 = vpop.f32.mrb[0].mxu0
        %1235 = vmatprep.mubr.f32.mxu0 0.0
        %v1236 = vand.u32 %v317, 4294901760
        %1237 = vmatmul.mubr.f32.gmra.mrb[0].mxu0 %v1236
        %v1238 = vpop.f32.mrb[0].mxu0
        %v1239 = vadd.f32 %v1071, %v1238
        %v1240 = vpop.f32.mrb[0].mxu0
        %1241 = vmatprep.mubr.f32.mxu0 0.0
        %v1242 = vand.u32 %v320, 4294901760
        %1243 = vmatmul.mubr.f32.gmra.mrb[0].mxu0 %v1242
        %v1244 = vpop.f32.mrb[0].mxu0
        %v1245 = vadd.f32 %v1079, %v1244
        %v1246 = vpop.f32.mrb[0].mxu0
        %1247 = vmatprep.mubr.f32.mxu0 0.0
        %v1248 = vand.u32 %v323, 4294901760
        %1249 = vmatmul.mubr.f32.gmra.mrb[0].mxu0 %v1248
        %v1250 = vpop.f32.mrb[0].mxu0
        %v1251 = vadd.f32 %v1087, %v1250
        %v1252 = vpop.f32.mrb[0].mxu0
        %1253 = vdwg.mxu0
        %1254 = vmatprep.subr.mxu0 0.0
        %v1255 = vand.u32 %v275, 4294901760
        %1256 = vmatpush1.msra.mxu0 %v1255
        %1257 = vmatprep.subr.mxu0 0.0
        %1258 = vmatpush1.msra.mxu0 0.0
        %1259 = vmatprep.subr.mxu0 0.0
        %1260 = vmatpush1.msra.mxu0 0.0
        %1261 = vmatprep.subr.mxu0 0.0
        %1262 = vmatpush1.msra.mxu0 0.0
        %1263 = vmatprep.subr.mxu0 0.0
        %1264 = vmatpush1.msra.mxu0 0.0
        %1265 = vmatprep.subr.mxu0 0.0
        %1266 = vmatpush1.msra.mxu0 0.0
        %1267 = vmatprep.subr.mxu0 0.0
        %1268 = vmatpush1.msra.mxu0 0.0
        %1269 = vmatprep.subr.mxu0 0.0
        %1270 = vmatpush1.msra.mxu0 0.0
        %1271 = vmatprep.subr.mxu0 0.0
        %1272 = vmatpush1.msra.mxu0 0.0
        %1273 = vmatprep.subr.mxu0 0.0
        %1274 = vmatpush1.msra.mxu0 0.0
        %1275 = vmatprep.subr.mxu0 0.0
        %1276 = vmatpush1.msra.mxu0 0.0
        %1277 = vmatprep.subr.mxu0 0.0
        %1278 = vmatpush1.msra.mxu0 0.0
        %1279 = vmatprep.subr.mxu0 0.0
        %1280 = vmatpush1.msra.mxu0 0.0
        %1281 = vmatprep.subr.mxu0 0.0
        %1282 = vmatpush1.msra.mxu0 0.0
        %1283 = vmatprep.subr.mxu0 0.0
        %1284 = vmatpush1.msra.mxu0 0.0
        %1285 = vmatprep.subr.mxu0 0.0
        %1286 = vmatpush1.msra.mxu0 0.0
        %1287 = vmatprep.subr.mxu0 0.0
        %1288 = vmatpush1.msra.mxu0 0.0
        %1289 = vmatprep.subr.mxu0 0.0
        %1290 = vmatpush1.msra.mxu0 0.0
        %1291 = vmatprep.subr.mxu0 0.0
        %1292 = vmatpush1.msra.mxu0 0.0
        %1293 = vmatprep.subr.mxu0 0.0
        %1294 = vmatpush1.msra.mxu0 0.0
        %1295 = vmatprep.subr.mxu0 0.0
        %1296 = vmatpush1.msra.mxu0 0.0
        %1297 = vmatprep.subr.mxu0 0.0
        %1298 = vmatpush1.msra.mxu0 0.0
        %1299 = vmatprep.subr.mxu0 0.0
        %1300 = vmatpush1.msra.mxu0 0.0
        %1301 = vmatprep.subr.mxu0 0.0
        %1302 = vmatpush1.msra.mxu0 0.0
        %1303 = vmatprep.subr.mxu0 0.0
        %1304 = vmatpush1.msra.mxu0 0.0
        %1305 = vmatprep.subr.mxu0 0.0
        %1306 = vmatpush1.msra.mxu0 0.0
        %1307 = vmatprep.subr.mxu0 0.0
        %1308 = vmatpush1.msra.mxu0 0.0
        %1309 = vmatprep.subr.mxu0 0.0
        %1310 = vmatpush1.msra.mxu0 0.0
        %1311 = vmatprep.subr.mxu0 0.0
        %1312 = vmatpush1.msra.mxu0 0.0
        %1313 = vmatprep.subr.mxu0 0.0
        %1314 = vmatpush1.msra.mxu0 0.0
        %1315 = vmatprep.subr.mxu0 0.0
        %1316 = vmatpush1.msra.mxu0 0.0
        %1317 = vmatprep.subr.mxu0 0.0
        %1318 = vmatpush1.msra.mxu0 0.0
        %1319 = vmatprep.mubr.f32.mxu0 0.0
        %v1320 = vand.u32 %v278, 4294901760
        %1321 = vmatmul.mubr.f32.gmra.mrb[0].mxu0 %v1320
        %v1322 = vpop.f32.mrb[0].mxu0
        %v1323 = vadd.f32 %v1161, %v1322
        %v1324 = vpop.f32.mrb[0].mxu0
        %1325 = vmatprep.mubr.f32.mxu0 0.0
        %v1326 = vand.u32 %v281, 4294901760
        %1327 = vmatmul.mubr.f32.gmra.mrb[0].mxu0 %v1326
        %v1328 = vpop.f32.mrb[0].mxu0
        %v1329 = vadd.f32 %v1167, %v1328
        %v1330 = vpop.f32.mrb[0].mxu0
        %1331 = vmatprep.mubr.f32.mxu0 0.0
        %v1332 = vand.u32 %v284, 4294901760
        %1333 = vmatmul.mubr.f32.gmra.mrb[0].mxu0 %v1332
        %v1334 = vpop.f32.mrb[0].mxu0
        %v1335 = vadd.f32 %v1173, %v1334
        %v1336 = vpop.f32.mrb[0].mxu0
        %1337 = vmatprep.mubr.f32.mxu0 0.0
        %v1338 = vand.u32 %v287, 4294901760
        %1339 = vmatmul.mubr.f32.gmra.mrb[0].mxu0 %v1338
        %v1340 = vpop.f32.mrb[0].mxu0
        %v1341 = vadd.f32 %v1179, %v1340
        %v1342 = vpop.f32.mrb[0].mxu0
        %1343 = vmatprep.mubr.f32.mxu0 0.0
        %v1344 = vand.u32 %v290, 4294901760
        %1345 = vmatmul.mubr.f32.gmra.mrb[0].mxu0 %v1344
        %v1346 = vpop.f32.mrb[0].mxu0
        %v1347 = vadd.f32 %v1185, %v1346
        %v1348 = vpop.f32.mrb[0].mxu0
        %1349 = vmatprep.mubr.f32.mxu0 0.0
        %v1350 = vand.u32 %v293, 4294901760
        %1351 = vmatmul.mubr.f32.gmra.mrb[0].mxu0 %v1350
        %v1352 = vpop.f32.mrb[0].mxu0
        %v1353 = vadd.f32 %v1191, %v1352
        %v1354 = vpop.f32.mrb[0].mxu0
        %1355 = vmatprep.mubr.f32.mxu0 0.0
        %v1356 = vand.u32 %v296, 4294901760
        %1357 = vmatmul.mubr.f32.gmra.mrb[0].mxu0 %v1356
        %v1358 = vpop.f32.mrb[0].mxu0
        %v1359 = vadd.f32 %v1197, %v1358
        %v1360 = vpop.f32.mrb[0].mxu0
        %1361 = vmatprep.mubr.f32.mxu0 0.0
        %v1362 = vand.u32 %v299, 4294901760
        %1363 = vmatmul.mubr.f32.gmra.mrb[0].mxu0 %v1362
        %v1364 = vpop.f32.mrb[0].mxu0
        %v1365 = vadd.f32 %v1203, %v1364
        %v1366 = vpop.f32.mrb[0].mxu0
        %1367 = vmatprep.mubr.f32.mxu0 0.0
        %v1368 = vand.u32 %v302, 4294901760
        %1369 = vmatmul.mubr.f32.gmra.mrb[0].mxu0 %v1368
        %v1370 = vpop.f32.mrb[0].mxu0
        %v1371 = vadd.f32 %v1209, %v1370
        %v1372 = vpop.f32.mrb[0].mxu0
        %1373 = vmatprep.mubr.f32.mxu0 0.0
        %v1374 = vand.u32 %v305, 4294901760
        %1375 = vmatmul.mubr.f32.gmra.mrb[0].mxu0 %v1374
        %v1376 = vpop.f32.mrb[0].mxu0
        %v1377 = vadd.f32 %v1215, %v1376
        %v1378 = vpop.f32.mrb[0].mxu0
        %1379 = vmatprep.mubr.f32.mxu0 0.0
        %v1380 = vand.u32 %v308, 4294901760
        %1381 = vmatmul.mubr.f32.gmra.mrb[0].mxu0 %v1380
        %v1382 = vpop.f32.mrb[0].mxu0
        %v1383 = vadd.f32 %v1221, %v1382
        %v1384 = vpop.f32.mrb[0].mxu0
        %1385 = vmatprep.mubr.f32.mxu0 0.0
        %v1386 = vand.u32 %v311, 4294901760
        %1387 = vmatmul.mubr.f32.gmra.mrb[0].mxu0 %v1386
        %v1388 = vpop.f32.mrb[0].mxu0
        %v1389 = vadd.f32 %v1227, %v1388
        %v1390 = vpop.f32.mrb[0].mxu0
        %1391 = vmatprep.mubr.f32.mxu0 0.0
        %v1392 = vand.u32 %v314, 4294901760
        %1393 = vmatmul.mubr.f32.gmra.mrb[0].mxu0 %v1392
        %v1394 = vpop.f32.mrb[0].mxu0
        %v1395 = vadd.f32 %v1233, %v1394
        %v1396 = vpop.f32.mrb[0].mxu0
        %1397 = vmatprep.mubr.f32.mxu0 0.0
        %v1398 = vand.u32 %v317, 4294901760
        %1399 = vmatmul.mubr.f32.gmra.mrb[0].mxu0 %v1398
        %v1400 = vpop.f32.mrb[0].mxu0
        %v1401 = vadd.f32 %v1239, %v1400
        %v1402 = vpop.f32.mrb[0].mxu0
        %1403 = vmatprep.mubr.f32.mxu0 0.0
        %v1404 = vand.u32 %v320, 4294901760
        %1405 = vmatmul.mubr.f32.gmra.mrb[0].mxu0 %v1404
        %v1406 = vpop.f32.mrb[0].mxu0
        %v1407 = vadd.f32 %v1245, %v1406
        %v1408 = vpop.f32.mrb[0].mxu0
        %1409 = vmatprep.mubr.f32.mxu0 0.0
        %v1410 = vand.u32 %v323, 4294901760
        %1411 = vmatmul.mubr.f32.gmra.mrb[0].mxu0 %v1410
        %v1412 = vpop.f32.mrb[0].mxu0
        %v1413 = vadd.f32 %v1251, %v1412
        %v1414 = vpop.f32.mrb[0].mxu0
        %1415 = vdwg.mxu0
        %p1416 = scmp.eq.s32.totalorder %s25, 0
        // Predicated region
        $region29: #{tpu_custom_call.1} parent=27 // pred_check
          %p1417 = pneg %p1416
        $region30: #{tpu_custom_call.1} parent=27 // pred_check_branch
          %1419 = sbr.rel (%p1417) target = $region32
        $region31: #{tpu_custom_call.1} parent=27 // pred_region
          %1420 = vst [vmem:[#allocation2] sm:$0xff] inf
          %1421 = vst [vmem:[#allocation2 + $0x8] sm:$0xff] inf
          %1422 = vst [vmem:[#allocation2 + $0x10] sm:$0xff] inf
          %1423 = vst [vmem:[#allocation2 + $0x18] sm:$0xff] inf
          %1424 = vst [vmem:[#allocation2 + $0x20] sm:$0xff] inf
          %1425 = vst [vmem:[#allocation2 + $0x28] sm:$0xff] inf
          %1426 = vst [vmem:[#allocation2 + $0x30] sm:$0xff] inf
          %1427 = vst [vmem:[#allocation2 + $0x38] sm:$0xff] inf
          %1428 = vst [vmem:[#allocation2 + $0x40] sm:$0xff] inf
          %1429 = vst [vmem:[#allocation2 + $0x48] sm:$0xff] inf
          %1430 = vst [vmem:[#allocation2 + $0x50] sm:$0xff] inf
          %1431 = vst [vmem:[#allocation2 + $0x58] sm:$0xff] inf
          %1432 = vst [vmem:[#allocation2 + $0x60] sm:$0xff] inf
          %1433 = vst [vmem:[#allocation2 + $0x68] sm:$0xff] inf
          %1434 = vst [vmem:[#allocation2 + $0x70] sm:$0xff] inf
          %1435 = vst [vmem:[#allocation2 + $0x78] sm:$0xff] inf
        $region32: #{tpu_custom_call.1} parent=27 // pred_fallthru
          _
        %p1436 = scmp.ne.s32.totalorder %s25, 0
        // Predicated region
        $region33: #{tpu_custom_call.1} parent=27 // pred_check
          %p1437 = pneg %p1436
        $region34: #{tpu_custom_call.1} parent=27 // pred_check_branch
          %1439 = sbr.rel (%p1437) target = $region36
        $region35: #{tpu_custom_call.1} parent=27 // pred_region
          %v1440 = vld [vmem:[#allocation2] sm:$0xff]
          %v1441 = vld [vmem:[#allocation2 + $0x8] sm:$0xff]
          %v1442 = vld [vmem:[#allocation2 + $0x10] sm:$0xff]
          %v1443 = vld [vmem:[#allocation2 + $0x18] sm:$0xff]
          %v1444 = vld [vmem:[#allocation2 + $0x20] sm:$0xff]
          %v1445 = vld [vmem:[#allocation2 + $0x28] sm:$0xff]
          %v1446 = vld [vmem:[#allocation2 + $0x30] sm:$0xff]
          %v1447 = vld [vmem:[#allocation2 + $0x38] sm:$0xff]
          %v1448 = vld [vmem:[#allocation2 + $0x40] sm:$0xff]
          %v1449 = vld [vmem:[#allocation2 + $0x48] sm:$0xff]
          %v1450 = vld [vmem:[#allocation2 + $0x50] sm:$0xff]
          %v1451 = vld [vmem:[#allocation2 + $0x58] sm:$0xff]
          %v1452 = vld [vmem:[#allocation2 + $0x60] sm:$0xff]
          %v1453 = vld [vmem:[#allocation2 + $0x68] sm:$0xff]
          %v1454 = vld [vmem:[#allocation2 + $0x70] sm:$0xff]
          %v1455 = vld [vmem:[#allocation2 + $0x78] sm:$0xff]
          %v1456 = vmin.f32 %v1440, %v1323
          %v1457 = vmin.f32 %v1441, %v1329
          %v1458 = vmin.f32 %v1442, %v1335
          %v1459 = vmin.f32 %v1443, %v1341
          %v1460 = vmin.f32 %v1444, %v1347
          %v1461 = vmin.f32 %v1445, %v1353
          %v1462 = vmin.f32 %v1446, %v1359
          %v1463 = vmin.f32 %v1447, %v1365
          %v1464 = vmin.f32 %v1448, %v1371
          %v1465 = vmin.f32 %v1449, %v1377
          %v1466 = vmin.f32 %v1450, %v1383
          %v1467 = vmin.f32 %v1451, %v1389
          %v1468 = vmin.f32 %v1452, %v1395
          %v1469 = vmin.f32 %v1453, %v1401
          %v1470 = vmin.f32 %v1454, %v1407
          %v1471 = vmin.f32 %v1455, %v1413
          %1472 = vst [vmem:[#allocation2] sm:$0xff] %v1456
          %1473 = vst [vmem:[#allocation2 + $0x8] sm:$0xff] %v1457
          %1474 = vst [vmem:[#allocation2 + $0x10] sm:$0xff] %v1458
          %1475 = vst [vmem:[#allocation2 + $0x18] sm:$0xff] %v1459
          %1476 = vst [vmem:[#allocation2 + $0x20] sm:$0xff] %v1460
          %1477 = vst [vmem:[#allocation2 + $0x28] sm:$0xff] %v1461
          %1478 = vst [vmem:[#allocation2 + $0x30] sm:$0xff] %v1462
          %1479 = vst [vmem:[#allocation2 + $0x38] sm:$0xff] %v1463
          %1480 = vst [vmem:[#allocation2 + $0x40] sm:$0xff] %v1464
          %1481 = vst [vmem:[#allocation2 + $0x48] sm:$0xff] %v1465
          %1482 = vst [vmem:[#allocation2 + $0x50] sm:$0xff] %v1466
          %1483 = vst [vmem:[#allocation2 + $0x58] sm:$0xff] %v1467
          %1484 = vst [vmem:[#allocation2 + $0x60] sm:$0xff] %v1468
          %1485 = vst [vmem:[#allocation2 + $0x68] sm:$0xff] %v1469
          %1486 = vst [vmem:[#allocation2 + $0x70] sm:$0xff] %v1470
          %1487 = vst [vmem:[#allocation2 + $0x78] sm:$0xff] %v1471
        $region36: #{tpu_custom_call.1} parent=27 // pred_fallthru
          _
        // Predicated region
        $region37: #{tpu_custom_call.1} parent=27 // pred_check
          %p1488 = pneg %p1416
        $region38: #{tpu_custom_call.1} parent=27 // pred_check_branch
          %1490 = sbr.rel (%p1488) target = $region40
        $region39: #{tpu_custom_call.1} parent=27 // pred_region
          %v1491 = vlaneseq
          %v1492 = vand.u32 %v1491, 127
          %vm1493 = vcmp.lt.s32.totalorder %v1492, 64
          %v1494 = vsel %vm1493, 1, 0
          %vm1495 = vcmp.eq.s32.totalorder %v1494, 1
          %v1496 = vsel %vm1495, %v1323, inf
          %v1497 = vsel %vm1495, %v1329, inf
          %v1498 = vsel %vm1495, %v1335, inf
          %v1499 = vsel %vm1495, %v1341, inf
          %v1500 = vsel %vm1495, %v1347, inf
          %v1501 = vsel %vm1495, %v1353, inf
          %v1502 = vsel %vm1495, %v1359, inf
          %v1503 = vsel %vm1495, %v1365, inf
          %v1504 = vsel %vm1495, %v1371, inf
          %v1505 = vsel %vm1495, %v1377, inf
          %v1506 = vsel %vm1495, %v1383, inf
          %v1507 = vsel %vm1495, %v1389, inf
          %v1508 = vsel %vm1495, %v1395, inf
          %v1509 = vsel %vm1495, %v1401, inf
          %v1510 = vsel %vm1495, %v1407, inf
          %v1511 = vsel %vm1495, %v1413, inf
          %v1512 = vld [vmem:[#allocation2] sm:$0xff]
          %v1513 = vld [vmem:[#allocation2 + $0x8] sm:$0xff]
          %v1514 = vld [vmem:[#allocation2 + $0x10] sm:$0xff]
          %v1515 = vld [vmem:[#allocation2 + $0x18] sm:$0xff]
          %v1516 = vld [vmem:[#allocation2 + $0x20] sm:$0xff]
          %v1517 = vld [vmem:[#allocation2 + $0x28] sm:$0xff]
          %v1518 = vld [vmem:[#allocation2 + $0x30] sm:$0xff]
          %v1519 = vld [vmem:[#allocation2 + $0x38] sm:$0xff]
          %v1520 = vld [vmem:[#allocation2 + $0x40] sm:$0xff]
          %v1521 = vld [vmem:[#allocation2 + $0x48] sm:$0xff]
          %v1522 = vld [vmem:[#allocation2 + $0x50] sm:$0xff]
          %v1523 = vld [vmem:[#allocation2 + $0x58] sm:$0xff]
          %v1524 = vld [vmem:[#allocation2 + $0x60] sm:$0xff]
          %v1525 = vld [vmem:[#allocation2 + $0x68] sm:$0xff]
          %v1526 = vld [vmem:[#allocation2 + $0x70] sm:$0xff]
          %v1527 = vld [vmem:[#allocation2 + $0x78] sm:$0xff]
          %v1528 = vmin.f32 %v1512, %v1496
          %v1529 = vmin.f32 %v1513, %v1497
          %v1530 = vmin.f32 %v1514, %v1498
          %v1531 = vmin.f32 %v1515, %v1499
          %v1532 = vmin.f32 %v1516, %v1500
          %v1533 = vmin.f32 %v1517, %v1501
          %v1534 = vmin.f32 %v1518, %v1502
          %v1535 = vmin.f32 %v1519, %v1503
          %v1536 = vmin.f32 %v1520, %v1504
          %v1537 = vmin.f32 %v1521, %v1505
          %v1538 = vmin.f32 %v1522, %v1506
          %v1539 = vmin.f32 %v1523, %v1507
          %v1540 = vmin.f32 %v1524, %v1508
          %v1541 = vmin.f32 %v1525, %v1509
          %v1542 = vmin.f32 %v1526, %v1510
          %v1543 = vmin.f32 %v1527, %v1511
          %1544 = vst [vmem:[#allocation2] sm:$0xff] %v1528
          %1545 = vst [vmem:[#allocation2 + $0x8] sm:$0xff] %v1529
          %1546 = vst [vmem:[#allocation2 + $0x10] sm:$0xff] %v1530
          %1547 = vst [vmem:[#allocation2 + $0x18] sm:$0xff] %v1531
          %1548 = vst [vmem:[#allocation2 + $0x20] sm:$0xff] %v1532
          %1549 = vst [vmem:[#allocation2 + $0x28] sm:$0xff] %v1533
          %1550 = vst [vmem:[#allocation2 + $0x30] sm:$0xff] %v1534
          %1551 = vst [vmem:[#allocation2 + $0x38] sm:$0xff] %v1535
          %1552 = vst [vmem:[#allocation2 + $0x40] sm:$0xff] %v1536
          %1553 = vst [vmem:[#allocation2 + $0x48] sm:$0xff] %v1537
          %1554 = vst [vmem:[#allocation2 + $0x50] sm:$0xff] %v1538
          %1555 = vst [vmem:[#allocation2 + $0x58] sm:$0xff] %v1539
          %1556 = vst [vmem:[#allocation2 + $0x60] sm:$0xff] %v1540
          %1557 = vst [vmem:[#allocation2 + $0x68] sm:$0xff] %v1541
          %1558 = vst [vmem:[#allocation2 + $0x70] sm:$0xff] %v1542
          %1559 = vst [vmem:[#allocation2 + $0x78] sm:$0xff] %v1543
          %v1560 = vld [vmem:[#allocation2] sm:$0xff]
          %v1561 = vld [vmem:[#allocation2 + $0x8] sm:$0xff]
          %v1562 = vld [vmem:[#allocation2 + $0x10] sm:$0xff]
          %v1563 = vld [vmem:[#allocation2 + $0x18] sm:$0xff]
          %v1564 = vld [vmem:[#allocation2 + $0x20] sm:$0xff]
          %v1565 = vld [vmem:[#allocation2 + $0x28] sm:$0xff]
          %v1566 = vld [vmem:[#allocation2 + $0x30] sm:$0xff]
          %v1567 = vld [vmem:[#allocation2 + $0x38] sm:$0xff]
          %v1568 = vld [vmem:[#allocation2 + $0x40] sm:$0xff]
          %v1569 = vld [vmem:[#allocation2 + $0x48] sm:$0xff]
          %v1570 = vld [vmem:[#allocation2 + $0x50] sm:$0xff]
          %v1571 = vld [vmem:[#allocation2 + $0x58] sm:$0xff]
          %v1572 = vld [vmem:[#allocation2 + $0x60] sm:$0xff]
          %v1573 = vld [vmem:[#allocation2 + $0x68] sm:$0xff]
          %v1574 = vld [vmem:[#allocation2 + $0x70] sm:$0xff]
          %v1575 = vld [vmem:[#allocation2 + $0x78] sm:$0xff]
          %1576 = vmin.xlane.f32.xlu0 %v1560
          %v1577 = vpop.xlane.xlu0 %1576
          %1578 = vmin.xlane.f32.xlu0 %v1561
          %v1579 = vpop.xlane.xlu0 %1578
          %1580 = vmin.xlane.f32.xlu0 %v1562
          %v1581 = vpop.xlane.xlu0 %1580
          %1582 = vmin.xlane.f32.xlu0 %v1563
          %v1583 = vpop.xlane.xlu0 %1582
          %1584 = vmin.xlane.f32.xlu0 %v1564
          %v1585 = vpop.xlane.xlu0 %1584
          %1586 = vmin.xlane.f32.xlu0 %v1565
          %v1587 = vpop.xlane.xlu0 %1586
          %1588 = vmin.xlane.f32.xlu0 %v1566
          %v1589 = vpop.xlane.xlu0 %1588
          %1590 = vmin.xlane.f32.xlu0 %v1567
          %v1591 = vpop.xlane.xlu0 %1590
          %1592 = vmin.xlane.f32.xlu0 %v1568
          %v1593 = vpop.xlane.xlu0 %1592
          %1594 = vmin.xlane.f32.xlu0 %v1569
          %v1595 = vpop.xlane.xlu0 %1594
          %1596 = vmin.xlane.f32.xlu0 %v1570
          %v1597 = vpop.xlane.xlu0 %1596
          %1598 = vmin.xlane.f32.xlu0 %v1571
          %v1599 = vpop.xlane.xlu0 %1598
          %1600 = vmin.xlane.f32.xlu0 %v1572
          %v1601 = vpop.xlane.xlu0 %1600
          %1602 = vmin.xlane.f32.xlu0 %v1573
          %v1603 = vpop.xlane.xlu0 %1602
          %1604 = vmin.xlane.f32.xlu0 %v1574
          %v1605 = vpop.xlane.xlu0 %1604
          %1606 = vmin.xlane.f32.xlu0 %v1575
          %v1607 = vpop.xlane.xlu0 %1606
          %v1608 = vmax.f32 %v1577, 0.0
          %v1609 = vmax.f32 %v1579, 0.0
          %v1610 = vmax.f32 %v1581, 0.0
          %v1611 = vmax.f32 %v1583, 0.0
          %v1612 = vmax.f32 %v1585, 0.0
          %v1613 = vmax.f32 %v1587, 0.0
          %v1614 = vmax.f32 %v1589, 0.0
          %v1615 = vmax.f32 %v1591, 0.0
          %v1616 = vmax.f32 %v1593, 0.0
          %v1617 = vmax.f32 %v1595, 0.0
          %v1618 = vmax.f32 %v1597, 0.0
          %v1619 = vmax.f32 %v1599, 0.0
          %v1620 = vmax.f32 %v1601, 0.0
          %v1621 = vmax.f32 %v1603, 0.0
          %v1622 = vmax.f32 %v1605, 0.0
          %v1623 = vmax.f32 %v1607, 0.0
          %vm1624 = vcmask 7168
          %1625 = vst.msk [vmem:[%s257] sm:$0xff] %vm1624, %v1608
          %1626 = vst.msk [vmem:[%s257 + $0x8] sm:$0xff] %vm1624, %v1609
          %1627 = vst.msk [vmem:[%s257 + $0x10] sm:$0xff] %vm1624, %v1610
          %1628 = vst.msk [vmem:[%s257 + $0x18] sm:$0xff] %vm1624, %v1611
          %1629 = vst.msk [vmem:[%s257 + $0x20] sm:$0xff] %vm1624, %v1612
          %1630 = vst.msk [vmem:[%s257 + $0x28] sm:$0xff] %vm1624, %v1613
          %1631 = vst.msk [vmem:[%s257 + $0x30] sm:$0xff] %vm1624, %v1614
          %1632 = vst.msk [vmem:[%s257 + $0x38] sm:$0xff] %vm1624, %v1615
          %1633 = vst.msk [vmem:[%s257 + $0x40] sm:$0xff] %vm1624, %v1616
          %1634 = vst.msk [vmem:[%s257 + $0x48] sm:$0xff] %vm1624, %v1617
          %1635 = vst.msk [vmem:[%s257 + $0x50] sm:$0xff] %vm1624, %v1618
          %1636 = vst.msk [vmem:[%s257 + $0x58] sm:$0xff] %vm1624, %v1619
          %1637 = vst.msk [vmem:[%s257 + $0x60] sm:$0xff] %vm1624, %v1620
          %1638 = vst.msk [vmem:[%s257 + $0x68] sm:$0xff] %vm1624, %v1621
          %1639 = vst.msk [vmem:[%s257 + $0x70] sm:$0xff] %vm1624, %v1622
          %1640 = vst.msk [vmem:[%s257 + $0x78] sm:$0xff] %vm1624, %v1623
        $region40: #{tpu_custom_call.1} parent=27 // pred_fallthru
          _
        %v1641 = vmin.f32 %v1323, %v1347
        %v1642 = vmin.f32 %v1329, %v1353
        %v1643 = vmin.f32 %v1335, %v1359
        %v1644 = vmin.f32 %v1341, %v1365
        %v1645 = vmin.f32 %v1641, %v1371
        %v1646 = vmin.f32 %v1642, %v1377
        %v1647 = vmin.f32 %v1643, %v1383
        %v1648 = vmin.f32 %v1644, %v1389
        %v1649 = vmin.f32 %v1645, %v1395
        %v1650 = vmin.f32 %v1646, %v1401
        %v1651 = vmin.f32 %v1647, %v1407
        %v1652 = vmin.f32 %v1648, %v1413
        %v1653 = vmin.f32 %v1649, %v1650
        %v1654 = vmin.f32 %v1651, %v1652
        %v1655 = vmin.f32 %v1653, %v1654
        %v1656 = vrot.slane %v1655, 4
        %v1657 = vmin.f32 %v1655, %v1656
        %v1658 = vrot.slane %v1657, 2
        %v1659 = vmin.f32 %v1657, %v1658
        %v1660 = vrot.slane %v1659, 1
        %v1661 = vmin.f32 %v1659, %v1660
        %v1662 = vmax.f32 %v1661, 0.0
        %1663 = vst [vmem:[%s231] sm:$0x1] %v1662
        %s1664 = smul.u32 16, %s24
        %p1665 = scmp.lt.s32.totalorder %s23, 1
        %s1666 = scalar_select %p1665, %s23, 1
        %p1667 = scmp.lt.s32.totalorder %s1664, 15
        %s1668 = scalar_select %p1667, %s1664, 15
        %s1669 = smul.addr %s1666, 16
        %s1670 = sadd.s32 %s1668, %s1669
        %s1671 = smul.addr %s1670, 8
        %s1672 = scalar_lea.vmem %s2, %s1671
        %s1673 = sand.u32 %s133, 1
        %s1674 = scalar_lea.sflag [#allocation4], %s1673
        %s1675 = sand.u32 %s133, 1
        %s1676 = scalar_lea.vmem [#allocation3], %s1675
        // Predicated region
        $region41: #{tpu_custom_call.1} parent=27 // pred_check
          %p1677 = pneg %p113
        $region42: #{tpu_custom_call.1} parent=27 // pred_check_branch
          %1679 = sbr.rel (%p1677) target = $region44
        $region43: #{tpu_custom_call.1} parent=27 // pred_region
          %s1680 = smul.u32 16, %s24
        $region44: #{tpu_custom_call.1} parent=27 // pred_fallthru
          _
        // Predicated region
        $region45: #{tpu_custom_call.1} parent=27 // pred_check
          %p1681 = pneg %p143
        $region46: #{tpu_custom_call.1} parent=27 // pred_check_branch
          %1683 = sbr.rel (%p1681) target = $region48
        $region47: #{tpu_custom_call.1} parent=27 // pred_region
          %s1685 = ssub.s32 16, 16
          %1686 = vsyncadd %s1674, %s1685
          %s1687 = sadd.s32 %s25, %s24
          %s1688 = sadd.s32 %s1687, %s23
          %s1689 = smul.addr %s1688, 16
          %s1690 = scalar_lea.hbm %s3, %s1689
          %s1692 = sshll.u32 %s1676, 4
          %s1693 = int_to_ptr.vmem [resolvable:$true] %s1692
          %1695 = dma.vmem_to_hbm [thread:$0]  %s1693, 16, %s1690, %s1674
        $region48: #{tpu_custom_call.1} parent=27 // pred_fallthru
          _
      $region28: #{tpu_custom_call.1} parent=5 // pred_fallthru
        _
      %p1696 = scmp.le.s32.totalorder 2, %s13
      // Predicated region
      $region49: #{tpu_custom_call.1} parent=5 // pred_check
        %p1697 = pneg %p1696
      $region50: #{tpu_custom_call.1} parent=5 // pred_check_branch
        %1699 = sbr.rel (%p1697) target = $region52
      $region51: #{tpu_custom_call.1} parent=5 // pred_region
        %s1700 = ssub.s32 %s13, 2
        // Predicated region
        $region53: #{tpu_custom_call.1} parent=51 // pred_check
          %p1701 = pneg %p119
        $region54: #{tpu_custom_call.1} parent=51 // pred_check_branch
          %1703 = sbr.rel (%p1701) target = $region56
        $region55: #{tpu_custom_call.1} parent=51 // pred_region
          %s1704 = smul.u32 16, %s27
          %p1705 = scmp.lt.s32.totalorder %s26, 1
          %s1706 = scalar_select %p1705, %s26, 1
          %p1707 = scmp.lt.s32.totalorder %s1704, 15
          %s1708 = scalar_select %p1707, %s1704, 15
          %s1709 = smul.addr %s1706, 16
          %s1710 = sadd.s32 %s1708, %s1709
          %s1711 = smul.addr %s1710, 8
          %s1712 = scalar_lea.vmem %s2, %s1711
        $region56: #{tpu_custom_call.1} parent=51 // pred_fallthru
          _
        // Predicated region
        $region57: #{tpu_custom_call.1} parent=51 // pred_check
          %p1713 = pneg %p149
        $region58: #{tpu_custom_call.1} parent=51 // pred_check_branch
          %1715 = sbr.rel (%p1713) target = $region60
        $region59: #{tpu_custom_call.1} parent=51 // pred_region
          %s1716 = sand.u32 %s134, 1
          %s1717 = scalar_lea.sflag [#allocation4], %s1716
          %s1718 = sand.u32 %s134, 1
          %s1719 = scalar_lea.vmem [#allocation3], %s1718
          %1720 = dma.done %s1717, 16
        $region60: #{tpu_custom_call.1} parent=51 // pred_fallthru
          _
      $region52: #{tpu_custom_call.1} parent=5 // pred_fallthru
        _
    $region6: #{tpu_custom_call.1} parent=1 // loop_footer
      %s17 = sadd.s32 1, %s13
    $region7: #{tpu_custom_call.1} parent=1 // loop_footer_branch
      %12 = sbr.rel target = $region3
    $region8: #{tpu_custom_call.1} parent=1 // loop_exit
      _
    %1721 = vsyncpa [#allocation4], 1
    %s1722 = scalar_lea.sflag [#allocation4], 1
    %1723 = vsyncpa %s1722, 1

</llo_original>
